<compile_context>
chip_gen: v5e
topology: v5e:2x2
jax: 0.10.0
libtpu: 0.0.40
codegen_flags: <defaults>
</compile_context>

<pallas_src>
import jax
import jax.numpy as jnp
from jax import lax
from jax.experimental import pallas as pl
from jax.experimental.pallas import tpu as pltpu


def _round_up(x, m):
    return ((x + m - 1) // m) * m


def _lstm_kernel(len_ref, xg_ref, w_hh_ref, w_fc_ref, b_fc_ref, out_ref):
    """One batch tile: full time recurrence + final FC.

    len_ref : (bt, 1)  int32   sequence lengths (padded rows = 0)
    xg_ref  : (T, bt, 4*Hp) f32  precomputed x_t @ W_ih^T + b  (gate order i,f,g,o)
    w_hh_ref: (Hp, 4*Hp) f32
    w_fc_ref: (Hp, Op)   f32
    b_fc_ref: (1, Op)    f32
    out_ref : (bt, Op)   f32
    """
    T = xg_ref.shape[0]
    bt = xg_ref.shape[1]
    Hp = w_hh_ref.shape[0]

    len_col = len_ref[...]           # (bt, 1), read once
    w_hh = w_hh_ref[...]             # resident for the whole loop

    h0 = jnp.zeros((bt, Hp), jnp.float32)
    c0 = jnp.zeros((bt, Hp), jnp.float32)

    def step(t, carry):
        h, c = carry
        # input projection precomputed -> only the recurrent matmul on the serial path
        gates = xg_ref[t] + jnp.dot(h, w_hh, preferred_element_type=jnp.float32)
        i_g = jax.nn.sigmoid(gates[:, 0 * Hp:1 * Hp])    # lane-aligned slices
        f_g = jax.nn.sigmoid(gates[:, 1 * Hp:2 * Hp])
        g_g = jnp.tanh(gates[:, 2 * Hp:3 * Hp])
        o_g = jax.nn.sigmoid(gates[:, 3 * Hp:4 * Hp])
        c_new = f_g * c + i_g * g_g
        h_new = o_g * jnp.tanh(c_new)
        valid = t < len_col                              # freeze past sequence end
        return (jnp.where(valid, h_new, h), jnp.where(valid, c_new, c))

    h, _ = lax.fori_loop(0, T, step, (h0, c0), unroll=True)

    out_ref[...] = (jnp.dot(h, w_fc_ref[...], preferred_element_type=jnp.float32)
                    + b_fc_ref[...])


def seq_lstm_forward(tokens, lengths, params, *, batch_tile=None):
    """tokens: (T, B) int32 (seq-first); lengths: (B,) int32. Returns (B, output_size)."""
    emb_table = params["embedding"]          # (V, E)
    w_ih_t = params["w_ih_t"]                # (E, 4H)  gate order i,f,g,o
    w_hh_t = params["w_hh_t"]                # (H, 4H)
    b_gates = params["b_gates"]              # (1, 4H)  (= b_ih + b_hh)
    w_fc_t = params["w_fc_t"]                # (H, O)
    b_fc = params["b_fc"]                    # (1, O)

    T, B = tokens.shape
    E = emb_table.shape[1]
    H = w_hh_t.shape[0]
    O = w_fc_t.shape[1]

    # ---- hardware-aligned padded sizes -------------------------------------
    if batch_tile is None:
        batch_tile = min(_round_up(B, 8), 128)
    Bp = _round_up(B, batch_tile)
    Hp = _round_up(H, 128)                   # per-gate lane alignment
    Op = _round_up(O, 128)                   # lane-dense output store

    # ---- pad weights per gate (zeros are inert: padded h/c lanes stay 0) ----
    def pad_gate_cols(w, rows_to):
        r = w.shape[0]
        out = jnp.zeros((rows_to, 4 * Hp), w.dtype)
        for g in range(4):
            out = out.at[:r, g * Hp:g * Hp + H].set(w[:, g * H:(g + 1) * H])
        return out

    w_ih_p = pad_gate_cols(w_ih_t, E)                                   # (E, 4Hp)
    w_hh_p = pad_gate_cols(w_hh_t, Hp)                                  # (Hp, 4Hp)
    b_p = pad_gate_cols(b_gates, 1)                                     # (1, 4Hp)
    w_fc_p = jnp.zeros((Hp, Op), w_fc_t.dtype).at[:H, :O].set(w_fc_t)   # (Hp, Op)
    b_fc_p = jnp.zeros((1, Op), b_fc.dtype).at[:, :O].set(b_fc)         # (1, Op)

    # ---- embedding gather + input projection (hoisted out of recurrence) ----
    embedded = emb_table[tokens]                                        # (T, B, E)
    xg = jnp.einsum("tbe,ef->tbf", embedded, w_ih_p) + b_p              # (T, B, 4Hp)
    xg = jnp.pad(xg, ((0, 0), (0, Bp - B), (0, 0))).astype(jnp.float32)  # (T, Bp, 4Hp)

    len_col = jnp.zeros((Bp, 1), jnp.int32).at[:B, 0].set(lengths.astype(jnp.int32))

    grid = (Bp // batch_tile,)
    grid_spec = pltpu.PrefetchScalarGridSpec(
        num_scalar_prefetch=0,
        grid=grid,
        in_specs=[
            pl.BlockSpec((batch_tile, 1), lambda b: (b, 0)),            # lengths
            pl.BlockSpec((T, batch_tile, 4 * Hp), lambda b: (0, b, 0)),  # x-projection
            pl.BlockSpec((Hp, 4 * Hp), lambda b: (0, 0)),               # W_hh^T
            pl.BlockSpec((Hp, Op), lambda b: (0, 0)),                   # W_fc^T
            pl.BlockSpec((1, Op), lambda b: (0, 0)),                    # b_fc
        ],
        out_specs=pl.BlockSpec((batch_tile, Op), lambda b: (b, 0)),
    )

    out = pl.pallas_call(
        _lstm_kernel,
        out_shape=jax.ShapeDtypeStruct((Bp, Op), jnp.float32),
        grid_spec=grid_spec,
        compiler_params=pltpu.CompilerParams(
            dimension_semantics=("parallel",)),      # batch tiles are independent
    )(len_col, xg, w_hh_p, w_fc_p, b_fc_p)

    return out[:B, :O]


def _reference_forward(tokens, lengths, params):
    """Pure-JAX reference of the packed-LSTM forward (same semantics)."""
    emb = params["embedding"][tokens]        # (T, B, E)
    w_ih_t, w_hh_t = params["w_ih_t"], params["w_hh_t"]
    b = params["b_gates"][0]
    H = w_hh_t.shape[0]
    T, B, _ = emb.shape
    h = jnp.zeros((B, H), jnp.float32)
    c = jnp.zeros((B, H), jnp.float32)
    for t in range(T):
        gates = emb[t] @ w_ih_t + h @ w_hh_t + b
        i = jax.nn.sigmoid(gates[:, 0 * H:1 * H])
        f = jax.nn.sigmoid(gates[:, 1 * H:2 * H])
        g = jnp.tanh(gates[:, 2 * H:3 * H])
        o = jax.nn.sigmoid(gates[:, 3 * H:4 * H])
        c_new = f * c + i * g
        h_new = o * jnp.tanh(c_new)
        valid = (t < lengths).reshape(B, 1)
        h = jnp.where(valid, h_new, h)
        c = jnp.where(valid, c_new, c)
    return h @ params["w_fc_t"] + params["b_fc"][0]


def make_params(key, vocab, emb_size, hidden, out_size):
    ks = jax.random.split(key, 7)
    bound = 1.0 / jnp.sqrt(hidden)
    u = lambda k, shape: jax.random.uniform(k, shape, jnp.float32, -bound, bound)
    w_ih = u(ks[1], (4 * hidden, emb_size))     # PyTorch weight_ih_l0
    w_hh = u(ks[2], (4 * hidden, hidden))       # PyTorch weight_hh_l0
    b_ih = u(ks[3], (4 * hidden,))
    b_hh = u(ks[4], (4 * hidden,))
    w_fc = u(ks[5], (out_size, hidden))
    b_fc = u(ks[6], (out_size,))
    return {
        "embedding": jax.random.normal(ks[0], (vocab, emb_size), jnp.float32),
        "w_ih_t": jnp.transpose(w_ih),                 # (E, 4H)
        "w_hh_t": jnp.transpose(w_hh),                 # (H, 4H)
        "b_gates": (b_ih + b_hh).reshape(1, 4 * hidden),
        "w_fc_t": jnp.transpose(w_fc),                 # (H, O)
        "b_fc": b_fc.reshape(1, out_size),
    }


if __name__ == "__main__":
    # small shapes: vocab=32, emb=16, hidden=32, output=8, seq T=8, batch B=4
    VOCAB, EMB, HID, OUT = 32, 16, 32, 8
    T, B = 8, 4

    key = jax.random.PRNGKey(0)
    k_tok, k_par = jax.random.split(key)
    params = make_params(k_par, VOCAB, EMB, HID, OUT)

    tokens = jax.random.randint(k_tok, (T, B), 0, VOCAB, dtype=jnp.int32)
    # pack_padded_sequence expects descending lengths
    lengths = jnp.array([8, 6, 5, 3], dtype=jnp.int32)

    logits = seq_lstm_forward(tokens, lengths, params)
    logits = jax.block_until_ready(logits)

    ref = _reference_forward(tokens, lengths, params)
    assert logits.shape == (B, OUT)
    assert jnp.max(jnp.abs(logits - ref)) < 1e-4

    print("KERNEL_OK")
</pallas_src>

<mosaic_0001>
module attributes {stable_mosaic.version = 11 : i64} {
  func.func @_lstm_kernel(%arg0: i32, %arg1: memref<8x1xi32, #tpu.memory_space<vmem>>, %arg2: memref<8x8x512xf32, #tpu.memory_space<vmem>>, %arg3: memref<128x512xf32, #tpu.memory_space<vmem>>, %arg4: memref<128x128xf32, #tpu.memory_space<vmem>>, %arg5: memref<1x128xf32, #tpu.memory_space<vmem>>, %arg6: memref<8x128xf32, #tpu.memory_space<vmem>>) attributes {dimension_semantics = [#tpu.dimension_semantics<parallel>], iteration_bounds = array<i64: 1>, scalar_prefetch = 0 : i64, scratch_operands = 0 : i64, tpu.core_type = #tpu.core_type<tc>, window_params = [{transform_indices = @transform_0, window_bounds = array<i64: 8, 1>}, {transform_indices = @transform_1, window_bounds = array<i64: 8, 8, 512>}, {pipeline_mode = #tpu.pipeline_mode<synchronous>, transform_indices = @transform_2, window_bounds = array<i64: 128, 512>}, {pipeline_mode = #tpu.pipeline_mode<synchronous>, transform_indices = @transform_3, window_bounds = array<i64: 128, 128>}, {pipeline_mode = #tpu.pipeline_mode<synchronous>, transform_indices = @transform_4, window_bounds = array<i64: 1, 128>}, {transform_indices = @transform_5, window_bounds = array<i64: 8, 128>}]} {
    %c0 = arith.constant 0 : index
    %c0_0 = arith.constant 0 : index
    %0 = vector.load %arg1[%c0, %c0_0] : memref<8x1xi32, #tpu.memory_space<vmem>>, vector<8x1xi32>
    %c0_1 = arith.constant 0 : index
    %c0_2 = arith.constant 0 : index
    %1 = vector.load %arg3[%c0_1, %c0_2] : memref<128x512xf32, #tpu.memory_space<vmem>>, vector<128x512xf32>
    %cst = arith.constant 0.000000e+00 : f32
    %2 = vector.broadcast %cst : f32 to vector<8x128xf32>
    %cst_3 = arith.constant 0.000000e+00 : f32
    %3 = vector.broadcast %cst_3 : f32 to vector<8x128xf32>
    %c0_i32 = arith.constant 0 : i32
    %4 = arith.index_cast %c0_i32 : i32 to index
    %c0_4 = arith.constant 0 : index
    %c0_5 = arith.constant 0 : index
    %5 = vector.load %arg2[%4, %c0_4, %c0_5] : memref<8x8x512xf32, #tpu.memory_space<vmem>>, vector<1x8x512xf32>
    %6 = vector.shape_cast %5 : vector<1x8x512xf32> to vector<8x512xf32>
    %cst_6 = arith.constant dense<0.000000e+00> : vector<8x512xf32>
    %7 = tpu.matmul %2, %1, %cst_6 {dimension_numbers = #tpu.dot_dimension_numbers<[1], [0], [0], [1], [0, 0, 1, 1], [], []>} : vector<8x128xf32>, vector<128x512xf32>, vector<8x512xf32> -> vector<8x512xf32>
    %8 = arith.addf %6, %7 : vector<8x512xf32>
    %9 = vector.extract_strided_slice %8 {offsets = [0, 0], sizes = [8, 128], strides = [1, 1]} : vector<8x512xf32> to vector<8x128xf32>
    %10 = arith.negf %9 : vector<8x128xf32>
    %11 = math.exp %10 : vector<8x128xf32>
    %cst_7 = arith.constant 1.000000e+00 : f32
    %12 = vector.broadcast %cst_7 : f32 to vector<8x128xf32>
    %13 = arith.addf %12, %11 : vector<8x128xf32>
    %14 = arith.divf %12, %13 : vector<8x128xf32>
    %15 = vector.extract_strided_slice %8 {offsets = [0, 128], sizes = [8, 128], strides = [1, 1]} : vector<8x512xf32> to vector<8x128xf32>
    %16 = arith.negf %15 : vector<8x128xf32>
    %17 = math.exp %16 : vector<8x128xf32>
    %cst_8 = arith.constant 1.000000e+00 : f32
    %18 = vector.broadcast %cst_8 : f32 to vector<8x128xf32>
    %19 = arith.addf %18, %17 : vector<8x128xf32>
    %20 = arith.divf %18, %19 : vector<8x128xf32>
    %21 = vector.extract_strided_slice %8 {offsets = [0, 256], sizes = [8, 128], strides = [1, 1]} : vector<8x512xf32> to vector<8x128xf32>
    %22 = math.tanh %21 : vector<8x128xf32>
    %23 = vector.extract_strided_slice %8 {offsets = [0, 384], sizes = [8, 128], strides = [1, 1]} : vector<8x512xf32> to vector<8x128xf32>
    %24 = arith.negf %23 : vector<8x128xf32>
    %25 = math.exp %24 : vector<8x128xf32>
    %cst_9 = arith.constant 1.000000e+00 : f32
    %26 = vector.broadcast %cst_9 : f32 to vector<8x128xf32>
    %27 = arith.addf %26, %25 : vector<8x128xf32>
    %28 = arith.divf %26, %27 : vector<8x128xf32>
    %29 = arith.mulf %20, %3 : vector<8x128xf32>
    %30 = arith.mulf %14, %22 : vector<8x128xf32>
    %31 = arith.addf %29, %30 : vector<8x128xf32>
    %32 = math.tanh %31 : vector<8x128xf32>
    %33 = arith.mulf %28, %32 : vector<8x128xf32>
    %34 = vector.broadcast %c0_i32 : i32 to vector<8x1xi32>
    %35 = arith.cmpi slt, %34, %0 : vector<8x1xi32>
    %36 = vector.shape_cast %35 : vector<8x1xi1> to vector<8x1xi1>
    %37 = vector.broadcast %36 : vector<8x1xi1> to vector<8x128xi1>
    %38 = arith.select %37, %33, %2 : vector<8x128xi1>, vector<8x128xf32>
    %39 = vector.shape_cast %35 : vector<8x1xi1> to vector<8x1xi1>
    %40 = vector.broadcast %39 : vector<8x1xi1> to vector<8x128xi1>
    %41 = arith.select %40, %31, %3 : vector<8x128xi1>, vector<8x128xf32>
    %c1_i32 = arith.constant 1 : i32
    %42 = arith.index_cast %c1_i32 : i32 to index
    %c0_10 = arith.constant 0 : index
    %c0_11 = arith.constant 0 : index
    %43 = vector.load %arg2[%42, %c0_10, %c0_11] : memref<8x8x512xf32, #tpu.memory_space<vmem>>, vector<1x8x512xf32>
    %44 = vector.shape_cast %43 : vector<1x8x512xf32> to vector<8x512xf32>
    %cst_12 = arith.constant dense<0.000000e+00> : vector<8x512xf32>
    %45 = tpu.matmul %38, %1, %cst_12 {dimension_numbers = #tpu.dot_dimension_numbers<[1], [0], [0], [1], [0, 0, 1, 1], [], []>} : vector<8x128xf32>, vector<128x512xf32>, vector<8x512xf32> -> vector<8x512xf32>
    %46 = arith.addf %44, %45 : vector<8x512xf32>
    %47 = vector.extract_strided_slice %46 {offsets = [0, 0], sizes = [8, 128], strides = [1, 1]} : vector<8x512xf32> to vector<8x128xf32>
    %48 = arith.negf %47 : vector<8x128xf32>
    %49 = math.exp %48 : vector<8x128xf32>
    %cst_13 = arith.constant 1.000000e+00 : f32
    %50 = vector.broadcast %cst_13 : f32 to vector<8x128xf32>
    %51 = arith.addf %50, %49 : vector<8x128xf32>
    %52 = arith.divf %50, %51 : vector<8x128xf32>
    %53 = vector.extract_strided_slice %46 {offsets = [0, 128], sizes = [8, 128], strides = [1, 1]} : vector<8x512xf32> to vector<8x128xf32>
    %54 = arith.negf %53 : vector<8x128xf32>
    %55 = math.exp %54 : vector<8x128xf32>
    %cst_14 = arith.constant 1.000000e+00 : f32
    %56 = vector.broadcast %cst_14 : f32 to vector<8x128xf32>
    %57 = arith.addf %56, %55 : vector<8x128xf32>
    %58 = arith.divf %56, %57 : vector<8x128xf32>
    %59 = vector.extract_strided_slice %46 {offsets = [0, 256], sizes = [8, 128], strides = [1, 1]} : vector<8x512xf32> to vector<8x128xf32>
    %60 = math.tanh %59 : vector<8x128xf32>
    %61 = vector.extract_strided_slice %46 {offsets = [0, 384], sizes = [8, 128], strides = [1, 1]} : vector<8x512xf32> to vector<8x128xf32>
    %62 = arith.negf %61 : vector<8x128xf32>
    %63 = math.exp %62 : vector<8x128xf32>
    %cst_15 = arith.constant 1.000000e+00 : f32
    %64 = vector.broadcast %cst_15 : f32 to vector<8x128xf32>
    %65 = arith.addf %64, %63 : vector<8x128xf32>
    %66 = arith.divf %64, %65 : vector<8x128xf32>
    %67 = arith.mulf %58, %41 : vector<8x128xf32>
    %68 = arith.mulf %52, %60 : vector<8x128xf32>
    %69 = arith.addf %67, %68 : vector<8x128xf32>
    %70 = math.tanh %69 : vector<8x128xf32>
    %71 = arith.mulf %66, %70 : vector<8x128xf32>
    %72 = vector.broadcast %c1_i32 : i32 to vector<8x1xi32>
    %73 = arith.cmpi slt, %72, %0 : vector<8x1xi32>
    %74 = vector.shape_cast %73 : vector<8x1xi1> to vector<8x1xi1>
    %75 = vector.broadcast %74 : vector<8x1xi1> to vector<8x128xi1>
    %76 = arith.select %75, %71, %38 : vector<8x128xi1>, vector<8x128xf32>
    %77 = vector.shape_cast %73 : vector<8x1xi1> to vector<8x1xi1>
    %78 = vector.broadcast %77 : vector<8x1xi1> to vector<8x128xi1>
    %79 = arith.select %78, %69, %41 : vector<8x128xi1>, vector<8x128xf32>
    %c2_i32 = arith.constant 2 : i32
    %80 = arith.index_cast %c2_i32 : i32 to index
    %c0_16 = arith.constant 0 : index
    %c0_17 = arith.constant 0 : index
    %81 = vector.load %arg2[%80, %c0_16, %c0_17] : memref<8x8x512xf32, #tpu.memory_space<vmem>>, vector<1x8x512xf32>
    %82 = vector.shape_cast %81 : vector<1x8x512xf32> to vector<8x512xf32>
    %cst_18 = arith.constant dense<0.000000e+00> : vector<8x512xf32>
    %83 = tpu.matmul %76, %1, %cst_18 {dimension_numbers = #tpu.dot_dimension_numbers<[1], [0], [0], [1], [0, 0, 1, 1], [], []>} : vector<8x128xf32>, vector<128x512xf32>, vector<8x512xf32> -> vector<8x512xf32>
    %84 = arith.addf %82, %83 : vector<8x512xf32>
    %85 = vector.extract_strided_slice %84 {offsets = [0, 0], sizes = [8, 128], strides = [1, 1]} : vector<8x512xf32> to vector<8x128xf32>
    %86 = arith.negf %85 : vector<8x128xf32>
    %87 = math.exp %86 : vector<8x128xf32>
    %cst_19 = arith.constant 1.000000e+00 : f32
    %88 = vector.broadcast %cst_19 : f32 to vector<8x128xf32>
    %89 = arith.addf %88, %87 : vector<8x128xf32>
    %90 = arith.divf %88, %89 : vector<8x128xf32>
    %91 = vector.extract_strided_slice %84 {offsets = [0, 128], sizes = [8, 128], strides = [1, 1]} : vector<8x512xf32> to vector<8x128xf32>
    %92 = arith.negf %91 : vector<8x128xf32>
    %93 = math.exp %92 : vector<8x128xf32>
    %cst_20 = arith.constant 1.000000e+00 : f32
    %94 = vector.broadcast %cst_20 : f32 to vector<8x128xf32>
    %95 = arith.addf %94, %93 : vector<8x128xf32>
    %96 = arith.divf %94, %95 : vector<8x128xf32>
    %97 = vector.extract_strided_slice %84 {offsets = [0, 256], sizes = [8, 128], strides = [1, 1]} : vector<8x512xf32> to vector<8x128xf32>
    %98 = math.tanh %97 : vector<8x128xf32>
    %99 = vector.extract_strided_slice %84 {offsets = [0, 384], sizes = [8, 128], strides = [1, 1]} : vector<8x512xf32> to vector<8x128xf32>
    %100 = arith.negf %99 : vector<8x128xf32>
    %101 = math.exp %100 : vector<8x128xf32>
    %cst_21 = arith.constant 1.000000e+00 : f32
    %102 = vector.broadcast %cst_21 : f32 to vector<8x128xf32>
    %103 = arith.addf %102, %101 : vector<8x128xf32>
    %104 = arith.divf %102, %103 : vector<8x128xf32>
    %105 = arith.mulf %96, %79 : vector<8x128xf32>
    %106 = arith.mulf %90, %98 : vector<8x128xf32>
    %107 = arith.addf %105, %106 : vector<8x128xf32>
    %108 = math.tanh %107 : vector<8x128xf32>
    %109 = arith.mulf %104, %108 : vector<8x128xf32>
    %110 = vector.broadcast %c2_i32 : i32 to vector<8x1xi32>
    %111 = arith.cmpi slt, %110, %0 : vector<8x1xi32>
    %112 = vector.shape_cast %111 : vector<8x1xi1> to vector<8x1xi1>
    %113 = vector.broadcast %112 : vector<8x1xi1> to vector<8x128xi1>
    %114 = arith.select %113, %109, %76 : vector<8x128xi1>, vector<8x128xf32>
    %115 = vector.shape_cast %111 : vector<8x1xi1> to vector<8x1xi1>
    %116 = vector.broadcast %115 : vector<8x1xi1> to vector<8x128xi1>
    %117 = arith.select %116, %107, %79 : vector<8x128xi1>, vector<8x128xf32>
    %c3_i32 = arith.constant 3 : i32
    %118 = arith.index_cast %c3_i32 : i32 to index
    %c0_22 = arith.constant 0 : index
    %c0_23 = arith.constant 0 : index
    %119 = vector.load %arg2[%118, %c0_22, %c0_23] : memref<8x8x512xf32, #tpu.memory_space<vmem>>, vector<1x8x512xf32>
    %120 = vector.shape_cast %119 : vector<1x8x512xf32> to vector<8x512xf32>
    %cst_24 = arith.constant dense<0.000000e+00> : vector<8x512xf32>
    %121 = tpu.matmul %114, %1, %cst_24 {dimension_numbers = #tpu.dot_dimension_numbers<[1], [0], [0], [1], [0, 0, 1, 1], [], []>} : vector<8x128xf32>, vector<128x512xf32>, vector<8x512xf32> -> vector<8x512xf32>
    %122 = arith.addf %120, %121 : vector<8x512xf32>
    %123 = vector.extract_strided_slice %122 {offsets = [0, 0], sizes = [8, 128], strides = [1, 1]} : vector<8x512xf32> to vector<8x128xf32>
    %124 = arith.negf %123 : vector<8x128xf32>
    %125 = math.exp %124 : vector<8x128xf32>
    %cst_25 = arith.constant 1.000000e+00 : f32
    %126 = vector.broadcast %cst_25 : f32 to vector<8x128xf32>
    %127 = arith.addf %126, %125 : vector<8x128xf32>
    %128 = arith.divf %126, %127 : vector<8x128xf32>
    %129 = vector.extract_strided_slice %122 {offsets = [0, 128], sizes = [8, 128], strides = [1, 1]} : vector<8x512xf32> to vector<8x128xf32>
    %130 = arith.negf %129 : vector<8x128xf32>
    %131 = math.exp %130 : vector<8x128xf32>
    %cst_26 = arith.constant 1.000000e+00 : f32
    %132 = vector.broadcast %cst_26 : f32 to vector<8x128xf32>
    %133 = arith.addf %132, %131 : vector<8x128xf32>
    %134 = arith.divf %132, %133 : vector<8x128xf32>
    %135 = vector.extract_strided_slice %122 {offsets = [0, 256], sizes = [8, 128], strides = [1, 1]} : vector<8x512xf32> to vector<8x128xf32>
    %136 = math.tanh %135 : vector<8x128xf32>
    %137 = vector.extract_strided_slice %122 {offsets = [0, 384], sizes = [8, 128], strides = [1, 1]} : vector<8x512xf32> to vector<8x128xf32>
    %138 = arith.negf %137 : vector<8x128xf32>
    %139 = math.exp %138 : vector<8x128xf32>
    %cst_27 = arith.constant 1.000000e+00 : f32
    %140 = vector.broadcast %cst_27 : f32 to vector<8x128xf32>
    %141 = arith.addf %140, %139 : vector<8x128xf32>
    %142 = arith.divf %140, %141 : vector<8x128xf32>
    %143 = arith.mulf %134, %117 : vector<8x128xf32>
    %144 = arith.mulf %128, %136 : vector<8x128xf32>
    %145 = arith.addf %143, %144 : vector<8x128xf32>
    %146 = math.tanh %145 : vector<8x128xf32>
    %147 = arith.mulf %142, %146 : vector<8x128xf32>
    %148 = vector.broadcast %c3_i32 : i32 to vector<8x1xi32>
    %149 = arith.cmpi slt, %148, %0 : vector<8x1xi32>
    %150 = vector.shape_cast %149 : vector<8x1xi1> to vector<8x1xi1>
    %151 = vector.broadcast %150 : vector<8x1xi1> to vector<8x128xi1>
    %152 = arith.select %151, %147, %114 : vector<8x128xi1>, vector<8x128xf32>
    %153 = vector.shape_cast %149 : vector<8x1xi1> to vector<8x1xi1>
    %154 = vector.broadcast %153 : vector<8x1xi1> to vector<8x128xi1>
    %155 = arith.select %154, %145, %117 : vector<8x128xi1>, vector<8x128xf32>
    %c4_i32 = arith.constant 4 : i32
    %156 = arith.index_cast %c4_i32 : i32 to index
    %c0_28 = arith.constant 0 : index
    %c0_29 = arith.constant 0 : index
    %157 = vector.load %arg2[%156, %c0_28, %c0_29] : memref<8x8x512xf32, #tpu.memory_space<vmem>>, vector<1x8x512xf32>
    %158 = vector.shape_cast %157 : vector<1x8x512xf32> to vector<8x512xf32>
    %cst_30 = arith.constant dense<0.000000e+00> : vector<8x512xf32>
    %159 = tpu.matmul %152, %1, %cst_30 {dimension_numbers = #tpu.dot_dimension_numbers<[1], [0], [0], [1], [0, 0, 1, 1], [], []>} : vector<8x128xf32>, vector<128x512xf32>, vector<8x512xf32> -> vector<8x512xf32>
    %160 = arith.addf %158, %159 : vector<8x512xf32>
    %161 = vector.extract_strided_slice %160 {offsets = [0, 0], sizes = [8, 128], strides = [1, 1]} : vector<8x512xf32> to vector<8x128xf32>
    %162 = arith.negf %161 : vector<8x128xf32>
    %163 = math.exp %162 : vector<8x128xf32>
    %cst_31 = arith.constant 1.000000e+00 : f32
    %164 = vector.broadcast %cst_31 : f32 to vector<8x128xf32>
    %165 = arith.addf %164, %163 : vector<8x128xf32>
    %166 = arith.divf %164, %165 : vector<8x128xf32>
    %167 = vector.extract_strided_slice %160 {offsets = [0, 128], sizes = [8, 128], strides = [1, 1]} : vector<8x512xf32> to vector<8x128xf32>
    %168 = arith.negf %167 : vector<8x128xf32>
    %169 = math.exp %168 : vector<8x128xf32>
    %cst_32 = arith.constant 1.000000e+00 : f32
    %170 = vector.broadcast %cst_32 : f32 to vector<8x128xf32>
    %171 = arith.addf %170, %169 : vector<8x128xf32>
    %172 = arith.divf %170, %171 : vector<8x128xf32>
    %173 = vector.extract_strided_slice %160 {offsets = [0, 256], sizes = [8, 128], strides = [1, 1]} : vector<8x512xf32> to vector<8x128xf32>
    %174 = math.tanh %173 : vector<8x128xf32>
    %175 = vector.extract_strided_slice %160 {offsets = [0, 384], sizes = [8, 128], strides = [1, 1]} : vector<8x512xf32> to vector<8x128xf32>
    %176 = arith.negf %175 : vector<8x128xf32>
    %177 = math.exp %176 : vector<8x128xf32>
    %cst_33 = arith.constant 1.000000e+00 : f32
    %178 = vector.broadcast %cst_33 : f32 to vector<8x128xf32>
    %179 = arith.addf %178, %177 : vector<8x128xf32>
    %180 = arith.divf %178, %179 : vector<8x128xf32>
    %181 = arith.mulf %172, %155 : vector<8x128xf32>
    %182 = arith.mulf %166, %174 : vector<8x128xf32>
    %183 = arith.addf %181, %182 : vector<8x128xf32>
    %184 = math.tanh %183 : vector<8x128xf32>
    %185 = arith.mulf %180, %184 : vector<8x128xf32>
    %186 = vector.broadcast %c4_i32 : i32 to vector<8x1xi32>
    %187 = arith.cmpi slt, %186, %0 : vector<8x1xi32>
    %188 = vector.shape_cast %187 : vector<8x1xi1> to vector<8x1xi1>
    %189 = vector.broadcast %188 : vector<8x1xi1> to vector<8x128xi1>
    %190 = arith.select %189, %185, %152 : vector<8x128xi1>, vector<8x128xf32>
    %191 = vector.shape_cast %187 : vector<8x1xi1> to vector<8x1xi1>
    %192 = vector.broadcast %191 : vector<8x1xi1> to vector<8x128xi1>
    %193 = arith.select %192, %183, %155 : vector<8x128xi1>, vector<8x128xf32>
    %c5_i32 = arith.constant 5 : i32
    %194 = arith.index_cast %c5_i32 : i32 to index
    %c0_34 = arith.constant 0 : index
    %c0_35 = arith.constant 0 : index
    %195 = vector.load %arg2[%194, %c0_34, %c0_35] : memref<8x8x512xf32, #tpu.memory_space<vmem>>, vector<1x8x512xf32>
    %196 = vector.shape_cast %195 : vector<1x8x512xf32> to vector<8x512xf32>
    %cst_36 = arith.constant dense<0.000000e+00> : vector<8x512xf32>
    %197 = tpu.matmul %190, %1, %cst_36 {dimension_numbers = #tpu.dot_dimension_numbers<[1], [0], [0], [1], [0, 0, 1, 1], [], []>} : vector<8x128xf32>, vector<128x512xf32>, vector<8x512xf32> -> vector<8x512xf32>
    %198 = arith.addf %196, %197 : vector<8x512xf32>
    %199 = vector.extract_strided_slice %198 {offsets = [0, 0], sizes = [8, 128], strides = [1, 1]} : vector<8x512xf32> to vector<8x128xf32>
    %200 = arith.negf %199 : vector<8x128xf32>
    %201 = math.exp %200 : vector<8x128xf32>
    %cst_37 = arith.constant 1.000000e+00 : f32
    %202 = vector.broadcast %cst_37 : f32 to vector<8x128xf32>
    %203 = arith.addf %202, %201 : vector<8x128xf32>
    %204 = arith.divf %202, %203 : vector<8x128xf32>
    %205 = vector.extract_strided_slice %198 {offsets = [0, 128], sizes = [8, 128], strides = [1, 1]} : vector<8x512xf32> to vector<8x128xf32>
    %206 = arith.negf %205 : vector<8x128xf32>
    %207 = math.exp %206 : vector<8x128xf32>
    %cst_38 = arith.constant 1.000000e+00 : f32
    %208 = vector.broadcast %cst_38 : f32 to vector<8x128xf32>
    %209 = arith.addf %208, %207 : vector<8x128xf32>
    %210 = arith.divf %208, %209 : vector<8x128xf32>
    %211 = vector.extract_strided_slice %198 {offsets = [0, 256], sizes = [8, 128], strides = [1, 1]} : vector<8x512xf32> to vector<8x128xf32>
    %212 = math.tanh %211 : vector<8x128xf32>
    %213 = vector.extract_strided_slice %198 {offsets = [0, 384], sizes = [8, 128], strides = [1, 1]} : vector<8x512xf32> to vector<8x128xf32>
    %214 = arith.negf %213 : vector<8x128xf32>
    %215 = math.exp %214 : vector<8x128xf32>
    %cst_39 = arith.constant 1.000000e+00 : f32
    %216 = vector.broadcast %cst_39 : f32 to vector<8x128xf32>
    %217 = arith.addf %216, %215 : vector<8x128xf32>
    %218 = arith.divf %216, %217 : vector<8x128xf32>
    %219 = arith.mulf %210, %193 : vector<8x128xf32>
    %220 = arith.mulf %204, %212 : vector<8x128xf32>
    %221 = arith.addf %219, %220 : vector<8x128xf32>
    %222 = math.tanh %221 : vector<8x128xf32>
    %223 = arith.mulf %218, %222 : vector<8x128xf32>
    %224 = vector.broadcast %c5_i32 : i32 to vector<8x1xi32>
    %225 = arith.cmpi slt, %224, %0 : vector<8x1xi32>
    %226 = vector.shape_cast %225 : vector<8x1xi1> to vector<8x1xi1>
    %227 = vector.broadcast %226 : vector<8x1xi1> to vector<8x128xi1>
    %228 = arith.select %227, %223, %190 : vector<8x128xi1>, vector<8x128xf32>
    %229 = vector.shape_cast %225 : vector<8x1xi1> to vector<8x1xi1>
    %230 = vector.broadcast %229 : vector<8x1xi1> to vector<8x128xi1>
    %231 = arith.select %230, %221, %193 : vector<8x128xi1>, vector<8x128xf32>
    %c6_i32 = arith.constant 6 : i32
    %232 = arith.index_cast %c6_i32 : i32 to index
    %c0_40 = arith.constant 0 : index
    %c0_41 = arith.constant 0 : index
    %233 = vector.load %arg2[%232, %c0_40, %c0_41] : memref<8x8x512xf32, #tpu.memory_space<vmem>>, vector<1x8x512xf32>
    %234 = vector.shape_cast %233 : vector<1x8x512xf32> to vector<8x512xf32>
    %cst_42 = arith.constant dense<0.000000e+00> : vector<8x512xf32>
    %235 = tpu.matmul %228, %1, %cst_42 {dimension_numbers = #tpu.dot_dimension_numbers<[1], [0], [0], [1], [0, 0, 1, 1], [], []>} : vector<8x128xf32>, vector<128x512xf32>, vector<8x512xf32> -> vector<8x512xf32>
    %236 = arith.addf %234, %235 : vector<8x512xf32>
    %237 = vector.extract_strided_slice %236 {offsets = [0, 0], sizes = [8, 128], strides = [1, 1]} : vector<8x512xf32> to vector<8x128xf32>
    %238 = arith.negf %237 : vector<8x128xf32>
    %239 = math.exp %238 : vector<8x128xf32>
    %cst_43 = arith.constant 1.000000e+00 : f32
    %240 = vector.broadcast %cst_43 : f32 to vector<8x128xf32>
    %241 = arith.addf %240, %239 : vector<8x128xf32>
    %242 = arith.divf %240, %241 : vector<8x128xf32>
    %243 = vector.extract_strided_slice %236 {offsets = [0, 128], sizes = [8, 128], strides = [1, 1]} : vector<8x512xf32> to vector<8x128xf32>
    %244 = arith.negf %243 : vector<8x128xf32>
    %245 = math.exp %244 : vector<8x128xf32>
    %cst_44 = arith.constant 1.000000e+00 : f32
    %246 = vector.broadcast %cst_44 : f32 to vector<8x128xf32>
    %247 = arith.addf %246, %245 : vector<8x128xf32>
    %248 = arith.divf %246, %247 : vector<8x128xf32>
    %249 = vector.extract_strided_slice %236 {offsets = [0, 256], sizes = [8, 128], strides = [1, 1]} : vector<8x512xf32> to vector<8x128xf32>
    %250 = math.tanh %249 : vector<8x128xf32>
    %251 = vector.extract_strided_slice %236 {offsets = [0, 384], sizes = [8, 128], strides = [1, 1]} : vector<8x512xf32> to vector<8x128xf32>
    %252 = arith.negf %251 : vector<8x128xf32>
    %253 = math.exp %252 : vector<8x128xf32>
    %cst_45 = arith.constant 1.000000e+00 : f32
    %254 = vector.broadcast %cst_45 : f32 to vector<8x128xf32>
    %255 = arith.addf %254, %253 : vector<8x128xf32>
    %256 = arith.divf %254, %255 : vector<8x128xf32>
    %257 = arith.mulf %248, %231 : vector<8x128xf32>
    %258 = arith.mulf %242, %250 : vector<8x128xf32>
    %259 = arith.addf %257, %258 : vector<8x128xf32>
    %260 = math.tanh %259 : vector<8x128xf32>
    %261 = arith.mulf %256, %260 : vector<8x128xf32>
    %262 = vector.broadcast %c6_i32 : i32 to vector<8x1xi32>
    %263 = arith.cmpi slt, %262, %0 : vector<8x1xi32>
    %264 = vector.shape_cast %263 : vector<8x1xi1> to vector<8x1xi1>
    %265 = vector.broadcast %264 : vector<8x1xi1> to vector<8x128xi1>
    %266 = arith.select %265, %261, %228 : vector<8x128xi1>, vector<8x128xf32>
    %267 = vector.shape_cast %263 : vector<8x1xi1> to vector<8x1xi1>
    %268 = vector.broadcast %267 : vector<8x1xi1> to vector<8x128xi1>
    %269 = arith.select %268, %259, %231 : vector<8x128xi1>, vector<8x128xf32>
    %c7_i32 = arith.constant 7 : i32
    %270 = arith.index_cast %c7_i32 : i32 to index
    %c0_46 = arith.constant 0 : index
    %c0_47 = arith.constant 0 : index
    %271 = vector.load %arg2[%270, %c0_46, %c0_47] : memref<8x8x512xf32, #tpu.memory_space<vmem>>, vector<1x8x512xf32>
    %272 = vector.shape_cast %271 : vector<1x8x512xf32> to vector<8x512xf32>
    %cst_48 = arith.constant dense<0.000000e+00> : vector<8x512xf32>
    %273 = tpu.matmul %266, %1, %cst_48 {dimension_numbers = #tpu.dot_dimension_numbers<[1], [0], [0], [1], [0, 0, 1, 1], [], []>} : vector<8x128xf32>, vector<128x512xf32>, vector<8x512xf32> -> vector<8x512xf32>
    %274 = arith.addf %272, %273 : vector<8x512xf32>
    %275 = vector.extract_strided_slice %274 {offsets = [0, 0], sizes = [8, 128], strides = [1, 1]} : vector<8x512xf32> to vector<8x128xf32>
    %276 = arith.negf %275 : vector<8x128xf32>
    %277 = math.exp %276 : vector<8x128xf32>
    %cst_49 = arith.constant 1.000000e+00 : f32
    %278 = vector.broadcast %cst_49 : f32 to vector<8x128xf32>
    %279 = arith.addf %278, %277 : vector<8x128xf32>
    %280 = arith.divf %278, %279 : vector<8x128xf32>
    %281 = vector.extract_strided_slice %274 {offsets = [0, 128], sizes = [8, 128], strides = [1, 1]} : vector<8x512xf32> to vector<8x128xf32>
    %282 = arith.negf %281 : vector<8x128xf32>
    %283 = math.exp %282 : vector<8x128xf32>
    %cst_50 = arith.constant 1.000000e+00 : f32
    %284 = vector.broadcast %cst_50 : f32 to vector<8x128xf32>
    %285 = arith.addf %284, %283 : vector<8x128xf32>
    %286 = arith.divf %284, %285 : vector<8x128xf32>
    %287 = vector.extract_strided_slice %274 {offsets = [0, 256], sizes = [8, 128], strides = [1, 1]} : vector<8x512xf32> to vector<8x128xf32>
    %288 = math.tanh %287 : vector<8x128xf32>
    %289 = vector.extract_strided_slice %274 {offsets = [0, 384], sizes = [8, 128], strides = [1, 1]} : vector<8x512xf32> to vector<8x128xf32>
    %290 = arith.negf %289 : vector<8x128xf32>
    %291 = math.exp %290 : vector<8x128xf32>
    %cst_51 = arith.constant 1.000000e+00 : f32
    %292 = vector.broadcast %cst_51 : f32 to vector<8x128xf32>
    %293 = arith.addf %292, %291 : vector<8x128xf32>
    %294 = arith.divf %292, %293 : vector<8x128xf32>
    %295 = arith.mulf %286, %269 : vector<8x128xf32>
    %296 = arith.mulf %280, %288 : vector<8x128xf32>
    %297 = arith.addf %295, %296 : vector<8x128xf32>
    %298 = math.tanh %297 : vector<8x128xf32>
    %299 = arith.mulf %294, %298 : vector<8x128xf32>
    %300 = vector.broadcast %c7_i32 : i32 to vector<8x1xi32>
    %301 = arith.cmpi slt, %300, %0 : vector<8x1xi32>
    %302 = vector.shape_cast %301 : vector<8x1xi1> to vector<8x1xi1>
    %303 = vector.broadcast %302 : vector<8x1xi1> to vector<8x128xi1>
    %304 = arith.select %303, %299, %266 : vector<8x128xi1>, vector<8x128xf32>
    %305 = vector.shape_cast %301 : vector<8x1xi1> to vector<8x1xi1>
    %306 = vector.broadcast %305 : vector<8x1xi1> to vector<8x128xi1>
    %307 = arith.select %306, %297, %269 : vector<8x128xi1>, vector<8x128xf32>
    %c8_i32 = arith.constant 8 : i32
    %c0_52 = arith.constant 0 : index
    %c0_53 = arith.constant 0 : index
    %308 = vector.load %arg4[%c0_52, %c0_53] : memref<128x128xf32, #tpu.memory_space<vmem>>, vector<128x128xf32>
    %cst_54 = arith.constant dense<0.000000e+00> : vector<8x128xf32>
    %309 = tpu.matmul %304, %308, %cst_54 {dimension_numbers = #tpu.dot_dimension_numbers<[1], [0], [0], [1], [0, 0, 1, 1], [], []>} : vector<8x128xf32>, vector<128x128xf32>, vector<8x128xf32> -> vector<8x128xf32>
    %c0_55 = arith.constant 0 : index
    %c0_56 = arith.constant 0 : index
    %310 = vector.load %arg5[%c0_55, %c0_56] : memref<1x128xf32, #tpu.memory_space<vmem>>, vector<1x128xf32>
    %311 = vector.broadcast %310 : vector<1x128xf32> to vector<8x128xf32>
    %312 = arith.addf %309, %311 : vector<8x128xf32>
    %c0_57 = arith.constant 0 : index
    %c0_58 = arith.constant 0 : index
    %313 = vector.load %arg6[%c0_57, %c0_58] : memref<8x128xf32, #tpu.memory_space<vmem>>, vector<8x128xf32>
    tpu.vector_store %arg6[%c0_57, %c0_58], %312 {strides = array<i32>} : memref<8x128xf32, #tpu.memory_space<vmem>>, vector<8x128xf32>,
    return
  }
  func.func @transform_0(%arg0: i32) -> (i32, i32) {
    %c0_i32 = arith.constant 0 : i32
    %c0_i32_0 = arith.constant 0 : i32
    return %arg0, %c0_i32 : i32, i32
  }
  func.func @transform_1(%arg0: i32) -> (i32, i32, i32) {
    %c0_i32 = arith.constant 0 : i32
    %c0_i32_0 = arith.constant 0 : i32
    %c0_i32_1 = arith.constant 0 : i32
    return %c0_i32, %arg0, %c0_i32_0 : i32, i32, i32
  }
  func.func @transform_2(%arg0: i32) -> (i32, i32) {
    %c0_i32 = arith.constant 0 : i32
    %c0_i32_0 = arith.constant 0 : i32
    %c0_i32_1 = arith.constant 0 : i32
    return %c0_i32, %c0_i32_0 : i32, i32
  }
  func.func @transform_3(%arg0: i32) -> (i32, i32) {
    %c0_i32 = arith.constant 0 : i32
    %c0_i32_0 = arith.constant 0 : i32
    %c0_i32_1 = arith.constant 0 : i32
    return %c0_i32, %c0_i32_0 : i32, i32
  }
  func.func @transform_4(%arg0: i32) -> (i32, i32) {
    %c0_i32 = arith.constant 0 : i32
    %c0_i32_0 = arith.constant 0 : i32
    %c0_i32_1 = arith.constant 0 : i32
    return %c0_i32, %c0_i32_0 : i32, i32
  }
  func.func @transform_5(%arg0: i32) -> (i32, i32) {
    %c0_i32 = arith.constant 0 : i32
    %c0_i32_0 = arith.constant 0 : i32
    return %arg0, %c0_i32 : i32, i32
  }
}

</mosaic_0001>

<llo_original>
// kernel: tpu_custom_call.1
$region0: #{tpu_custom_call.1}
  #allocation0 [shape = 'u32[]', space=smem, size = 0x4, offset = 0x4, fixed_abs, tag = 'smem constant byte address 0x4 - core index']
  #allocation1 [shape = 'u32[72,128]{1,0:T(1,128)}', space=vmem, size = 0x9000, scoped, tag = 'internal scratch']
  %s0 = inlined_call_operand.vmem [shape: s32[8,1], index: 0, kind: input, shape index: {}]
  %s1 = inlined_call_operand.hbm [shape: f32[8,8,512], index: 1, kind: input, shape index: {}]
  %s2 = inlined_call_operand.hbm [shape: f32[128,512], index: 2, kind: input, shape index: {}]
  %s3 = inlined_call_operand.hbm [shape: f32[128,128], index: 3, kind: input, shape index: {}]
  %s4 = inlined_call_operand.vmem [shape: f32[1,128], index: 4, kind: input, shape index: {}]
  %s5 = inlined_call_operand.hbm [shape: f32[8,128], index: 5, kind: output, shape index: {}]
  %s6 = sld [smem:[#allocation0]]
  $region42: #{tpu_custom_call.1} parent=0
    _
  %s8 = ssub.s32 1, %s6
  %s9 = scalar_select 0, %s8, %s6
  $region1: #{tpu_custom_call.1} parent=0
    #allocation2 [shape = 'u8[131072]{0}', space=vmem, size = 0x20000, scoped, tag = 'input window, operand 1, single buffered']
    #allocation3 [shape = 's32[1]{0}', space=sflag, size = 0x4, scoped, tag = 'scoped memory for tpu_custom_call.1']
    #allocation4 [shape = 's32[1]{0}', space=sflag, size = 0x4, scoped, tag = 'scoped memory for tpu_custom_call.1']
    #allocation5 [shape = 'u8[262144]{0}', space=vmem, size = 0x40000, scoped, tag = 'input window, operand 2, single buffered']
    #allocation6 [shape = 's32[1]{0}', space=sflag, size = 0x4, scoped, tag = 'scoped memory for tpu_custom_call.1']
    #allocation7 [shape = 'u8[65536]{0}', space=vmem, size = 0x10000, scoped, tag = 'input window, operand 3, single buffered']
    #allocation8 [shape = 'u8[4096]{0}', space=vmem, size = 0x1000, scoped, tag = 'output window, operand 0, single buffered']
    %10 = vsyncpa [#allocation3], 0
    %11 = vsyncpa [#allocation6], 0
    %12 = vsyncpa [#allocation4], 0
    // Predicated region
    $region2: #{tpu_custom_call.1} parent=1 // pred_check
      _
    $region3: #{tpu_custom_call.1} parent=1 // pred_check_branch
      %14 = sbr.rel (0) target = $region5
    $region4: #{tpu_custom_call.1} parent=1 // pred_region
      _
    $region5: #{tpu_custom_call.1} parent=1 // pred_fallthru
      _
    // Predicated region
    $region6: #{tpu_custom_call.1} parent=1 // pred_check
      _
    $region7: #{tpu_custom_call.1} parent=1 // pred_check_branch
      %16 = sbr.rel (0) target = $region9
    $region8: #{tpu_custom_call.1} parent=1 // pred_region
      %18 = vsyncadd [#allocation3], 0
      %s19 = sshll.u32 %s1, 4
      %s20 = int_to_ptr.hbm [resolvable:$true] %s19
      %s21 = sshll.u32 [#allocation2], 4
      %s22 = int_to_ptr.vmem [resolvable:$true] %s21
      %27 = dma.hbm_to_vmem [thread:$0]  %s20, 4096, %s22, [#allocation3], 512, 512, 32
    $region9: #{tpu_custom_call.1} parent=1 // pred_fallthru
      _
    // Predicated region
    $region10: #{tpu_custom_call.1} parent=1 // pred_check
      _
    $region11: #{tpu_custom_call.1} parent=1 // pred_check_branch
      %29 = sbr.rel (0) target = $region13
    $region12: #{tpu_custom_call.1} parent=1 // pred_region
      %31 = vsyncadd [#allocation6], 0
      %s32 = sshll.u32 %s2, 4
      %s33 = int_to_ptr.hbm [resolvable:$true] %s32
      %s34 = sshll.u32 [#allocation5], 4
      %s35 = int_to_ptr.vmem [resolvable:$true] %s34
      %40 = dma.hbm_to_vmem [thread:$0]  %s33, 8192, %s35, [#allocation6], 512, 512, 32
    $region13: #{tpu_custom_call.1} parent=1 // pred_fallthru
      _
    // Predicated region
    $region14: #{tpu_custom_call.1} parent=1 // pred_check
      _
    $region15: #{tpu_custom_call.1} parent=1 // pred_check_branch
      %42 = sbr.rel (0) target = $region17
    $region16: #{tpu_custom_call.1} parent=1 // pred_region
      %44 = vsyncadd [#allocation6], 0
      %s45 = sshll.u32 %s3, 4
      %s46 = int_to_ptr.hbm [resolvable:$true] %s45
      %s47 = sshll.u32 [#allocation7], 4
      %s48 = int_to_ptr.vmem [resolvable:$true] %s47
      %53 = dma.hbm_to_vmem [thread:$0]  %s46, 2048, %s48, [#allocation6], 128, 128, 8
    $region17: #{tpu_custom_call.1} parent=1 // pred_fallthru
      _
    // Predicated region
    $region18: #{tpu_custom_call.1} parent=1 // pred_check
      _
    $region19: #{tpu_custom_call.1} parent=1 // pred_check_branch
      %55 = sbr.rel (0) target = $region21
    $region20: #{tpu_custom_call.1} parent=1 // pred_region
      _
    $region21: #{tpu_custom_call.1} parent=1 // pred_fallthru
      _
    // Predicated region
    $region22: #{tpu_custom_call.1} parent=1 // pred_check
      _
    $region23: #{tpu_custom_call.1} parent=1 // pred_check_branch
      %57 = sbr.rel (0) target = $region25
    $region24: #{tpu_custom_call.1} parent=1 // pred_region
      %59 = dma.done [#allocation3], 4096
    $region25: #{tpu_custom_call.1} parent=1 // pred_fallthru
      _
    // Predicated region
    $region26: #{tpu_custom_call.1} parent=1 // pred_check
      _
    $region27: #{tpu_custom_call.1} parent=1 // pred_check_branch
      %61 = sbr.rel (0) target = $region29
    $region28: #{tpu_custom_call.1} parent=1 // pred_region
      %63 = dma.done [#allocation6], 8192
    $region29: #{tpu_custom_call.1} parent=1 // pred_fallthru
      _
    // Predicated region
    $region30: #{tpu_custom_call.1} parent=1 // pred_check
      _
    $region31: #{tpu_custom_call.1} parent=1 // pred_check_branch
      %65 = sbr.rel (0) target = $region33
    $region32: #{tpu_custom_call.1} parent=1 // pred_region
      %67 = dma.done [#allocation6], 2048
    $region33: #{tpu_custom_call.1} parent=1 // pred_fallthru
      _
    %v68 = vld [vmem:[%s0] sm:$0xff]
    %v69 = vld [vmem:[#allocation5] sm:$0xff]
    %v70 = vld [vmem:[#allocation5 + $0x8] sm:$0xff]
    %v71 = vld [vmem:[#allocation5 + $0x10] sm:$0xff]
    %v72 = vld [vmem:[#allocation5 + $0x18] sm:$0xff]
    %v73 = vld [vmem:[#allocation5 + $0x20] sm:$0xff]
    %v74 = vld [vmem:[#allocation5 + $0x28] sm:$0xff]
    %v75 = vld [vmem:[#allocation5 + $0x30] sm:$0xff]
    %v76 = vld [vmem:[#allocation5 + $0x38] sm:$0xff]
    %v77 = vld [vmem:[#allocation5 + $0x40] sm:$0xff]
    %v78 = vld [vmem:[#allocation5 + $0x48] sm:$0xff]
    %v79 = vld [vmem:[#allocation5 + $0x50] sm:$0xff]
    %v80 = vld [vmem:[#allocation5 + $0x58] sm:$0xff]
    %v81 = vld [vmem:[#allocation5 + $0x60] sm:$0xff]
    %v82 = vld [vmem:[#allocation5 + $0x68] sm:$0xff]
    %v83 = vld [vmem:[#allocation5 + $0x70] sm:$0xff]
    %v84 = vld [vmem:[#allocation5 + $0x78] sm:$0xff]
    %v85 = vld [vmem:[#allocation5 + $0x80] sm:$0xff]
    %v86 = vld [vmem:[#allocation5 + $0x88] sm:$0xff]
    %v87 = vld [vmem:[#allocation5 + $0x90] sm:$0xff]
    %v88 = vld [vmem:[#allocation5 + $0x98] sm:$0xff]
    %v89 = vld [vmem:[#allocation5 + $0xa0] sm:$0xff]
    %v90 = vld [vmem:[#allocation5 + $0xa8] sm:$0xff]
    %v91 = vld [vmem:[#allocation5 + $0xb0] sm:$0xff]
    %v92 = vld [vmem:[#allocation5 + $0xb8] sm:$0xff]
    %v93 = vld [vmem:[#allocation5 + $0xc0] sm:$0xff]
    %v94 = vld [vmem:[#allocation5 + $0xc8] sm:$0xff]
    %v95 = vld [vmem:[#allocation5 + $0xd0] sm:$0xff]
    %v96 = vld [vmem:[#allocation5 + $0xd8] sm:$0xff]
    %v97 = vld [vmem:[#allocation5 + $0xe0] sm:$0xff]
    %v98 = vld [vmem:[#allocation5 + $0xe8] sm:$0xff]
    %v99 = vld [vmem:[#allocation5 + $0xf0] sm:$0xff]
    %v100 = vld [vmem:[#allocation5 + $0xf8] sm:$0xff]
    %v101 = vld [vmem:[#allocation5 + $0x100] sm:$0xff]
    %v102 = vld [vmem:[#allocation5 + $0x108] sm:$0xff]
    %v103 = vld [vmem:[#allocation5 + $0x110] sm:$0xff]
    %v104 = vld [vmem:[#allocation5 + $0x118] sm:$0xff]
    %v105 = vld [vmem:[#allocation5 + $0x120] sm:$0xff]
    %v106 = vld [vmem:[#allocation5 + $0x128] sm:$0xff]
    %v107 = vld [vmem:[#allocation5 + $0x130] sm:$0xff]
    %v108 = vld [vmem:[#allocation5 + $0x138] sm:$0xff]
    %v109 = vld [vmem:[#allocation5 + $0x140] sm:$0xff]
    %v110 = vld [vmem:[#allocation5 + $0x148] sm:$0xff]
    %v111 = vld [vmem:[#allocation5 + $0x150] sm:$0xff]
    %v112 = vld [vmem:[#allocation5 + $0x158] sm:$0xff]
    %v113 = vld [vmem:[#allocation5 + $0x160] sm:$0xff]
    %v114 = vld [vmem:[#allocation5 + $0x168] sm:$0xff]
    %v115 = vld [vmem:[#allocation5 + $0x170] sm:$0xff]
    %v116 = vld [vmem:[#allocation5 + $0x178] sm:$0xff]
    %v117 = vld [vmem:[#allocation5 + $0x180] sm:$0xff]
    %v118 = vld [vmem:[#allocation5 + $0x188] sm:$0xff]
    %v119 = vld [vmem:[#allocation5 + $0x190] sm:$0xff]
    %v120 = vld [vmem:[#allocation5 + $0x198] sm:$0xff]
    %v121 = vld [vmem:[#allocation5 + $0x1a0] sm:$0xff]
    %v122 = vld [vmem:[#allocation5 + $0x1a8] sm:$0xff]
    %v123 = vld [vmem:[#allocation5 + $0x1b0] sm:$0xff]
    %v124 = vld [vmem:[#allocation5 + $0x1b8] sm:$0xff]
    %v125 = vld [vmem:[#allocation5 + $0x1c0] sm:$0xff]
    %v126 = vld [vmem:[#allocation5 + $0x1c8] sm:$0xff]
    %v127 = vld [vmem:[#allocation5 + $0x1d0] sm:$0xff]
    %v128 = vld [vmem:[#allocation5 + $0x1d8] sm:$0xff]
    %v129 = vld [vmem:[#allocation5 + $0x1e0] sm:$0xff]
    %v130 = vld [vmem:[#allocation5 + $0x1e8] sm:$0xff]
    %v131 = vld [vmem:[#allocation5 + $0x1f0] sm:$0xff]
    %v132 = vld [vmem:[#allocation5 + $0x1f8] sm:$0xff]
    %v133 = vld [vmem:[#allocation2] sm:$0xff]
    %v134 = vld [vmem:[#allocation2 + $0x8] sm:$0xff]
    %v135 = vld [vmem:[#allocation2 + $0x10] sm:$0xff]
    %v136 = vld [vmem:[#allocation2 + $0x18] sm:$0xff]
    %137 = vmatpush.msra.mxu0 %v129
    %138 = vmatpush.msra.mxu0 %v125
    %139 = vmatpush.msra.mxu0 %v121
    %140 = vmatpush.msra.mxu0 %v117
    %141 = vmatpush.msra.mxu0 %v113
    %142 = vmatpush.msra.mxu0 %v109
    %143 = vmatpush.msra.mxu0 %v105
    %144 = vmatpush.msra.mxu0 %v101
    %145 = vmatpush.msra.mxu0 %v97
    %146 = vmatpush.msra.mxu0 %v93
    %147 = vmatpush.msra.mxu0 %v89
    %148 = vmatpush.msra.mxu0 %v85
    %149 = vmatpush.msra.mxu0 %v81
    %150 = vmatpush.msra.mxu0 %v77
    %151 = vmatpush.msra.mxu0 %v73
    %152 = vmatpush.msra.mxu0 %v69
    %153 = vmatmul.f32.gmra.mxu0 0.0
    %v154 = vpop.f32.mrf.mxu0
    %v155 = vadd.f32 0.0, %v154
    %156 = vdwg.mxu0
    %157 = vmatpush.msra.mxu0 %v130
    %158 = vmatpush.msra.mxu0 %v126
    %159 = vmatpush.msra.mxu0 %v122
    %160 = vmatpush.msra.mxu0 %v118
    %161 = vmatpush.msra.mxu0 %v114
    %162 = vmatpush.msra.mxu0 %v110
    %163 = vmatpush.msra.mxu0 %v106
    %164 = vmatpush.msra.mxu0 %v102
    %165 = vmatpush.msra.mxu0 %v98
    %166 = vmatpush.msra.mxu0 %v94
    %167 = vmatpush.msra.mxu0 %v90
    %168 = vmatpush.msra.mxu0 %v86
    %169 = vmatpush.msra.mxu0 %v82
    %170 = vmatpush.msra.mxu0 %v78
    %171 = vmatpush.msra.mxu0 %v74
    %172 = vmatpush.msra.mxu0 %v70
    %173 = vmatmul.f32.gmra.mxu0 0.0
    %v174 = vpop.f32.mrf.mxu0
    %v175 = vadd.f32 0.0, %v174
    %176 = vdwg.mxu0
    %177 = vmatpush.msra.mxu0 %v131
    %178 = vmatpush.msra.mxu0 %v127
    %179 = vmatpush.msra.mxu0 %v123
    %180 = vmatpush.msra.mxu0 %v119
    %181 = vmatpush.msra.mxu0 %v115
    %182 = vmatpush.msra.mxu0 %v111
    %183 = vmatpush.msra.mxu0 %v107
    %184 = vmatpush.msra.mxu0 %v103
    %185 = vmatpush.msra.mxu0 %v99
    %186 = vmatpush.msra.mxu0 %v95
    %187 = vmatpush.msra.mxu0 %v91
    %188 = vmatpush.msra.mxu0 %v87
    %189 = vmatpush.msra.mxu0 %v83
    %190 = vmatpush.msra.mxu0 %v79
    %191 = vmatpush.msra.mxu0 %v75
    %192 = vmatpush.msra.mxu0 %v71
    %193 = vmatmul.f32.gmra.mxu0 0.0
    %v194 = vpop.f32.mrf.mxu0
    %v195 = vadd.f32 0.0, %v194
    %196 = vdwg.mxu0
    %197 = vmatpush.msra.mxu0 %v132
    %198 = vmatpush.msra.mxu0 %v128
    %199 = vmatpush.msra.mxu0 %v124
    %200 = vmatpush.msra.mxu0 %v120
    %201 = vmatpush.msra.mxu0 %v116
    %202 = vmatpush.msra.mxu0 %v112
    %203 = vmatpush.msra.mxu0 %v108
    %204 = vmatpush.msra.mxu0 %v104
    %205 = vmatpush.msra.mxu0 %v100
    %206 = vmatpush.msra.mxu0 %v96
    %207 = vmatpush.msra.mxu0 %v92
    %208 = vmatpush.msra.mxu0 %v88
    %209 = vmatpush.msra.mxu0 %v84
    %210 = vmatpush.msra.mxu0 %v80
    %211 = vmatpush.msra.mxu0 %v76
    %212 = vmatpush.msra.mxu0 %v72
    %213 = vmatmul.f32.gmra.mxu0 0.0
    %v214 = vpop.f32.mrf.mxu0
    %v215 = vadd.f32 0.0, %v214
    %216 = vdwg.mxu0
    %v217 = vadd.f32 %v133, %v155
    %v218 = vadd.f32 %v134, %v175
    %v219 = vadd.f32 %v135, %v195
    %v220 = vadd.f32 %v136, %v215
    %v221 = vxor.u32 %v217, 2147483648
    %v222 = vmul.f32 %v221, 1.442695
    %v223 = vpow.pop %v222
    %v224 = vadd.f32 %v223, 1.0
    %v225 = vrcp.pop %v224
    %v226 = vmul.f32 %v224, %v225
    %v227 = vsub.f32 1.0, %v226
    %v228 = vmul.f32 %v225, %v227
    %v229 = vadd.f32 %v225, %v228
    %vm230 = vweird.f32 %v224
    %vm231 = vweird.f32 %v225
    %vm232 = vmor %vm230, %vm231
    %v233 = vsel %vm232, %v225, %v229
    %v234 = vand.u32 2147483647, %v224
    %vm235 = vcmp.eq.f32.partialorder %v234, 8.507059e+37
    %v236 = vand.u32 %v224, 2147483648
    %v237 = vor.u32 1.1754944e-38, %v236
    %v238 = vsel %vm235, %v237, %v233
    %v239 = vmul.f32 1.0, %v238
    %v240 = vxor.u32 %v218, 2147483648
    %v241 = vmul.f32 %v240, 1.442695
    %v242 = vpow.pop %v241
    %v243 = vadd.f32 %v242, 1.0
    %v244 = vrcp.pop %v243
    %v245 = vmul.f32 %v243, %v244
    %v246 = vsub.f32 1.0, %v245
    %v247 = vmul.f32 %v244, %v246
    %v248 = vadd.f32 %v244, %v247
    %vm249 = vweird.f32 %v243
    %vm250 = vweird.f32 %v244
    %vm251 = vmor %vm249, %vm250
    %v252 = vsel %vm251, %v244, %v248
    %v253 = vand.u32 2147483647, %v243
    %vm254 = vcmp.eq.f32.partialorder %v253, 8.507059e+37
    %v255 = vand.u32 %v243, 2147483648
    %v256 = vor.u32 1.1754944e-38, %v255
    %v257 = vsel %vm254, %v256, %v252
    %v258 = vmul.f32 1.0, %v257
    %v259 = vtanh.pop %v219
    %v260 = vxor.u32 %v220, 2147483648
    %v261 = vmul.f32 %v260, 1.442695
    %v262 = vpow.pop %v261
    %v263 = vadd.f32 %v262, 1.0
    %v264 = vrcp.pop %v263
    %v265 = vmul.f32 %v263, %v264
    %v266 = vsub.f32 1.0, %v265
    %v267 = vmul.f32 %v264, %v266
    %v268 = vadd.f32 %v264, %v267
    %vm269 = vweird.f32 %v263
    %vm270 = vweird.f32 %v264
    %vm271 = vmor %vm269, %vm270
    %v272 = vsel %vm271, %v264, %v268
    %v273 = vand.u32 2147483647, %v263
    %vm274 = vcmp.eq.f32.partialorder %v273, 8.507059e+37
    %v275 = vand.u32 %v263, 2147483648
    %v276 = vor.u32 1.1754944e-38, %v275
    %v277 = vsel %vm274, %v276, %v272
    %v278 = vmul.f32 1.0, %v277
    %v279 = vmul.f32 %v258, 0.0
    %v280 = vmul.f32 %v239, %v259
    %v281 = vadd.f32 %v279, %v280
    %v282 = vtanh.pop %v281
    %v283 = vmul.f32 %v278, %v282
    %vm284 = vcmp.gt.s32.totalorder %v68, 0
    %v285 = vsel %vm284, 1, 0
    %286 = vset.pattern.permute.xlu0 0
    %287 = vperm.xlu0 %286, %v285
    %v288 = vpop.permute.xlu0 %287
    %vm289 = vcmp.eq.s32.totalorder %v288, 1
    %v290 = vsel %vm289, %v283, 0.0
    %v291 = vsel %vm289, %v281, 0.0
    %s292 = scalar_lea.vmem [#allocation2], 32
    %v293 = vld [vmem:[%s292] sm:$0xff]
    %v294 = vld [vmem:[%s292 + $0x8] sm:$0xff]
    %v295 = vld [vmem:[%s292 + $0x10] sm:$0xff]
    %v296 = vld [vmem:[%s292 + $0x18] sm:$0xff]
    %297 = vmatpush.msra.mxu0 %v129
    %298 = vmatpush.msra.mxu0 %v125
    %299 = vmatpush.msra.mxu0 %v121
    %300 = vmatpush.msra.mxu0 %v117
    %301 = vmatpush.msra.mxu0 %v113
    %302 = vmatpush.msra.mxu0 %v109
    %303 = vmatpush.msra.mxu0 %v105
    %304 = vmatpush.msra.mxu0 %v101
    %305 = vmatpush.msra.mxu0 %v97
    %306 = vmatpush.msra.mxu0 %v93
    %307 = vmatpush.msra.mxu0 %v89
    %308 = vmatpush.msra.mxu0 %v85
    %309 = vmatpush.msra.mxu0 %v81
    %310 = vmatpush.msra.mxu0 %v77
    %311 = vmatpush.msra.mxu0 %v73
    %312 = vmatpush.msra.mxu0 %v69
    %313 = vmatmul.f32.gmra.mxu0 %v290
    %v314 = vpop.f32.mrf.mxu0
    %v315 = vadd.f32 0.0, %v314
    %316 = vdwg.mxu0
    %317 = vmatpush.msra.mxu0 %v130
    %318 = vmatpush.msra.mxu0 %v126
    %319 = vmatpush.msra.mxu0 %v122
    %320 = vmatpush.msra.mxu0 %v118
    %321 = vmatpush.msra.mxu0 %v114
    %322 = vmatpush.msra.mxu0 %v110
    %323 = vmatpush.msra.mxu0 %v106
    %324 = vmatpush.msra.mxu0 %v102
    %325 = vmatpush.msra.mxu0 %v98
    %326 = vmatpush.msra.mxu0 %v94
    %327 = vmatpush.msra.mxu0 %v90
    %328 = vmatpush.msra.mxu0 %v86
    %329 = vmatpush.msra.mxu0 %v82
    %330 = vmatpush.msra.mxu0 %v78
    %331 = vmatpush.msra.mxu0 %v74
    %332 = vmatpush.msra.mxu0 %v70
    %333 = vmatmul.f32.gmra.mxu0 %v290
    %v334 = vpop.f32.mrf.mxu0
    %v335 = vadd.f32 0.0, %v334
    %336 = vdwg.mxu0
    %337 = vmatpush.msra.mxu0 %v131
    %338 = vmatpush.msra.mxu0 %v127
    %339 = vmatpush.msra.mxu0 %v123
    %340 = vmatpush.msra.mxu0 %v119
    %341 = vmatpush.msra.mxu0 %v115
    %342 = vmatpush.msra.mxu0 %v111
    %343 = vmatpush.msra.mxu0 %v107
    %344 = vmatpush.msra.mxu0 %v103
    %345 = vmatpush.msra.mxu0 %v99
    %346 = vmatpush.msra.mxu0 %v95
    %347 = vmatpush.msra.mxu0 %v91
    %348 = vmatpush.msra.mxu0 %v87
    %349 = vmatpush.msra.mxu0 %v83
    %350 = vmatpush.msra.mxu0 %v79
    %351 = vmatpush.msra.mxu0 %v75
    %352 = vmatpush.msra.mxu0 %v71
    %353 = vmatmul.f32.gmra.mxu0 %v290
    %v354 = vpop.f32.mrf.mxu0
    %v355 = vadd.f32 0.0, %v354
    %356 = vdwg.mxu0
    %357 = vmatpush.msra.mxu0 %v132
    %358 = vmatpush.msra.mxu0 %v128
    %359 = vmatpush.msra.mxu0 %v124
    %360 = vmatpush.msra.mxu0 %v120
    %361 = vmatpush.msra.mxu0 %v116
    %362 = vmatpush.msra.mxu0 %v112
    %363 = vmatpush.msra.mxu0 %v108
    %364 = vmatpush.msra.mxu0 %v104
    %365 = vmatpush.msra.mxu0 %v100
    %366 = vmatpush.msra.mxu0 %v96
    %367 = vmatpush.msra.mxu0 %v92
    %368 = vmatpush.msra.mxu0 %v88
    %369 = vmatpush.msra.mxu0 %v84
    %370 = vmatpush.msra.mxu0 %v80
    %371 = vmatpush.msra.mxu0 %v76
    %372 = vmatpush.msra.mxu0 %v72
    %373 = vmatmul.f32.gmra.mxu0 %v290
    %v374 = vpop.f32.mrf.mxu0
    %v375 = vadd.f32 0.0, %v374
    %376 = vdwg.mxu0
    %v377 = vadd.f32 %v293, %v315
    %v378 = vadd.f32 %v294, %v335
    %v379 = vadd.f32 %v295, %v355
    %v380 = vadd.f32 %v296, %v375
    %v381 = vxor.u32 %v377, 2147483648
    %v382 = vmul.f32 %v381, 1.442695
    %v383 = vpow.pop %v382
    %v384 = vadd.f32 %v383, 1.0
    %v385 = vrcp.pop %v384
    %v386 = vmul.f32 %v384, %v385
    %v387 = vsub.f32 1.0, %v386
    %v388 = vmul.f32 %v385, %v387
    %v389 = vadd.f32 %v385, %v388
    %vm390 = vweird.f32 %v384
    %vm391 = vweird.f32 %v385
    %vm392 = vmor %vm390, %vm391
    %v393 = vsel %vm392, %v385, %v389
    %v394 = vand.u32 2147483647, %v384
    %vm395 = vcmp.eq.f32.partialorder %v394, 8.507059e+37
    %v396 = vand.u32 %v384, 2147483648
    %v397 = vor.u32 1.1754944e-38, %v396
    %v398 = vsel %vm395, %v397, %v393
    %v399 = vmul.f32 1.0, %v398
    %v400 = vxor.u32 %v378, 2147483648
    %v401 = vmul.f32 %v400, 1.442695
    %v402 = vpow.pop %v401
    %v403 = vadd.f32 %v402, 1.0
    %v404 = vrcp.pop %v403
    %v405 = vmul.f32 %v403, %v404
    %v406 = vsub.f32 1.0, %v405
    %v407 = vmul.f32 %v404, %v406
    %v408 = vadd.f32 %v404, %v407
    %vm409 = vweird.f32 %v403
    %vm410 = vweird.f32 %v404
    %vm411 = vmor %vm409, %vm410
    %v412 = vsel %vm411, %v404, %v408
    %v413 = vand.u32 2147483647, %v403
    %vm414 = vcmp.eq.f32.partialorder %v413, 8.507059e+37
    %v415 = vand.u32 %v403, 2147483648
    %v416 = vor.u32 1.1754944e-38, %v415
    %v417 = vsel %vm414, %v416, %v412
    %v418 = vmul.f32 1.0, %v417
    %v419 = vtanh.pop %v379
    %v420 = vxor.u32 %v380, 2147483648
    %v421 = vmul.f32 %v420, 1.442695
    %v422 = vpow.pop %v421
    %v423 = vadd.f32 %v422, 1.0
    %v424 = vrcp.pop %v423
    %v425 = vmul.f32 %v423, %v424
    %v426 = vsub.f32 1.0, %v425
    %v427 = vmul.f32 %v424, %v426
    %v428 = vadd.f32 %v424, %v427
    %vm429 = vweird.f32 %v423
    %vm430 = vweird.f32 %v424
    %vm431 = vmor %vm429, %vm430
    %v432 = vsel %vm431, %v424, %v428
    %v433 = vand.u32 2147483647, %v423
    %vm434 = vcmp.eq.f32.partialorder %v433, 8.507059e+37
    %v435 = vand.u32 %v423, 2147483648
    %v436 = vor.u32 1.1754944e-38, %v435
    %v437 = vsel %vm434, %v436, %v432
    %v438 = vmul.f32 1.0, %v437
    %v439 = vmul.f32 %v418, %v291
    %v440 = vmul.f32 %v399, %v419
    %v441 = vadd.f32 %v439, %v440
    %v442 = vtanh.pop %v441
    %v443 = vmul.f32 %v438, %v442
    %vm444 = vcmp.gt.s32.totalorder %v68, 1
    %v445 = vsel %vm444, 1, 0
    %446 = vset.pattern.permute.xlu0 0
    %447 = vperm.xlu0 %446, %v445
    %v448 = vpop.permute.xlu0 %447
    %vm449 = vcmp.eq.s32.totalorder %v448, 1
    %v450 = vsel %vm449, %v443, %v290
    %v451 = vsel %vm449, %v441, %v291
    %s452 = scalar_lea.vmem [#allocation2], 64
    %v453 = vld [vmem:[%s452] sm:$0xff]
    %v454 = vld [vmem:[%s452 + $0x8] sm:$0xff]
    %v455 = vld [vmem:[%s452 + $0x10] sm:$0xff]
    %v456 = vld [vmem:[%s452 + $0x18] sm:$0xff]
    %457 = vmatpush.msra.mxu0 %v129
    %458 = vmatpush.msra.mxu0 %v125
    %459 = vmatpush.msra.mxu0 %v121
    %460 = vmatpush.msra.mxu0 %v117
    %461 = vmatpush.msra.mxu0 %v113
    %462 = vmatpush.msra.mxu0 %v109
    %463 = vmatpush.msra.mxu0 %v105
    %464 = vmatpush.msra.mxu0 %v101
    %465 = vmatpush.msra.mxu0 %v97
    %466 = vmatpush.msra.mxu0 %v93
    %467 = vmatpush.msra.mxu0 %v89
    %468 = vmatpush.msra.mxu0 %v85
    %469 = vmatpush.msra.mxu0 %v81
    %470 = vmatpush.msra.mxu0 %v77
    %471 = vmatpush.msra.mxu0 %v73
    %472 = vmatpush.msra.mxu0 %v69
    %473 = vmatmul.f32.gmra.mxu0 %v450
    %v474 = vpop.f32.mrf.mxu0
    %v475 = vadd.f32 0.0, %v474
    %476 = vdwg.mxu0
    %477 = vmatpush.msra.mxu0 %v130
    %478 = vmatpush.msra.mxu0 %v126
    %479 = vmatpush.msra.mxu0 %v122
    %480 = vmatpush.msra.mxu0 %v118
    %481 = vmatpush.msra.mxu0 %v114
    %482 = vmatpush.msra.mxu0 %v110
    %483 = vmatpush.msra.mxu0 %v106
    %484 = vmatpush.msra.mxu0 %v102
    %485 = vmatpush.msra.mxu0 %v98
    %486 = vmatpush.msra.mxu0 %v94
    %487 = vmatpush.msra.mxu0 %v90
    %488 = vmatpush.msra.mxu0 %v86
    %489 = vmatpush.msra.mxu0 %v82
    %490 = vmatpush.msra.mxu0 %v78
    %491 = vmatpush.msra.mxu0 %v74
    %492 = vmatpush.msra.mxu0 %v70
    %493 = vmatmul.f32.gmra.mxu0 %v450
    %v494 = vpop.f32.mrf.mxu0
    %v495 = vadd.f32 0.0, %v494
    %496 = vdwg.mxu0
    %497 = vmatpush.msra.mxu0 %v131
    %498 = vmatpush.msra.mxu0 %v127
    %499 = vmatpush.msra.mxu0 %v123
    %500 = vmatpush.msra.mxu0 %v119
    %501 = vmatpush.msra.mxu0 %v115
    %502 = vmatpush.msra.mxu0 %v111
    %503 = vmatpush.msra.mxu0 %v107
    %504 = vmatpush.msra.mxu0 %v103
    %505 = vmatpush.msra.mxu0 %v99
    %506 = vmatpush.msra.mxu0 %v95
    %507 = vmatpush.msra.mxu0 %v91
    %508 = vmatpush.msra.mxu0 %v87
    %509 = vmatpush.msra.mxu0 %v83
    %510 = vmatpush.msra.mxu0 %v79
    %511 = vmatpush.msra.mxu0 %v75
    %512 = vmatpush.msra.mxu0 %v71
    %513 = vmatmul.f32.gmra.mxu0 %v450
    %v514 = vpop.f32.mrf.mxu0
    %v515 = vadd.f32 0.0, %v514
    %516 = vdwg.mxu0
    %517 = vmatpush.msra.mxu0 %v132
    %518 = vmatpush.msra.mxu0 %v128
    %519 = vmatpush.msra.mxu0 %v124
    %520 = vmatpush.msra.mxu0 %v120
    %521 = vmatpush.msra.mxu0 %v116
    %522 = vmatpush.msra.mxu0 %v112
    %523 = vmatpush.msra.mxu0 %v108
    %524 = vmatpush.msra.mxu0 %v104
    %525 = vmatpush.msra.mxu0 %v100
    %526 = vmatpush.msra.mxu0 %v96
    %527 = vmatpush.msra.mxu0 %v92
    %528 = vmatpush.msra.mxu0 %v88
    %529 = vmatpush.msra.mxu0 %v84
    %530 = vmatpush.msra.mxu0 %v80
    %531 = vmatpush.msra.mxu0 %v76
    %532 = vmatpush.msra.mxu0 %v72
    %533 = vmatmul.f32.gmra.mxu0 %v450
    %v534 = vpop.f32.mrf.mxu0
    %v535 = vadd.f32 0.0, %v534
    %536 = vdwg.mxu0
    %v537 = vadd.f32 %v453, %v475
    %v538 = vadd.f32 %v454, %v495
    %v539 = vadd.f32 %v455, %v515
    %v540 = vadd.f32 %v456, %v535
    %v541 = vxor.u32 %v537, 2147483648
    %v542 = vmul.f32 %v541, 1.442695
    %v543 = vpow.pop %v542
    %v544 = vadd.f32 %v543, 1.0
    %v545 = vrcp.pop %v544
    %v546 = vmul.f32 %v544, %v545
    %v547 = vsub.f32 1.0, %v546
    %v548 = vmul.f32 %v545, %v547
    %v549 = vadd.f32 %v545, %v548
    %vm550 = vweird.f32 %v544
    %vm551 = vweird.f32 %v545
    %vm552 = vmor %vm550, %vm551
    %v553 = vsel %vm552, %v545, %v549
    %v554 = vand.u32 2147483647, %v544
    %vm555 = vcmp.eq.f32.partialorder %v554, 8.507059e+37
    %v556 = vand.u32 %v544, 2147483648
    %v557 = vor.u32 1.1754944e-38, %v556
    %v558 = vsel %vm555, %v557, %v553
    %v559 = vmul.f32 1.0, %v558
    %v560 = vxor.u32 %v538, 2147483648
    %v561 = vmul.f32 %v560, 1.442695
    %v562 = vpow.pop %v561
    %v563 = vadd.f32 %v562, 1.0
    %v564 = vrcp.pop %v563
    %v565 = vmul.f32 %v563, %v564
    %v566 = vsub.f32 1.0, %v565
    %v567 = vmul.f32 %v564, %v566
    %v568 = vadd.f32 %v564, %v567
    %vm569 = vweird.f32 %v563
    %vm570 = vweird.f32 %v564
    %vm571 = vmor %vm569, %vm570
    %v572 = vsel %vm571, %v564, %v568
    %v573 = vand.u32 2147483647, %v563
    %vm574 = vcmp.eq.f32.partialorder %v573, 8.507059e+37
    %v575 = vand.u32 %v563, 2147483648
    %v576 = vor.u32 1.1754944e-38, %v575
    %v577 = vsel %vm574, %v576, %v572
    %v578 = vmul.f32 1.0, %v577
    %v579 = vtanh.pop %v539
    %v580 = vxor.u32 %v540, 2147483648
    %v581 = vmul.f32 %v580, 1.442695
    %v582 = vpow.pop %v581
    %v583 = vadd.f32 %v582, 1.0
    %v584 = vrcp.pop %v583
    %v585 = vmul.f32 %v583, %v584
    %v586 = vsub.f32 1.0, %v585
    %v587 = vmul.f32 %v584, %v586
    %v588 = vadd.f32 %v584, %v587
    %vm589 = vweird.f32 %v583
    %vm590 = vweird.f32 %v584
    %vm591 = vmor %vm589, %vm590
    %v592 = vsel %vm591, %v584, %v588
    %v593 = vand.u32 2147483647, %v583
    %vm594 = vcmp.eq.f32.partialorder %v593, 8.507059e+37
    %v595 = vand.u32 %v583, 2147483648
    %v596 = vor.u32 1.1754944e-38, %v595
    %v597 = vsel %vm594, %v596, %v592
    %v598 = vmul.f32 1.0, %v597
    %v599 = vmul.f32 %v578, %v451
    %v600 = vmul.f32 %v559, %v579
    %v601 = vadd.f32 %v599, %v600
    %v602 = vtanh.pop %v601
    %v603 = vmul.f32 %v598, %v602
    %vm604 = vcmp.gt.s32.totalorder %v68, 2
    %v605 = vsel %vm604, 1, 0
    %606 = vset.pattern.permute.xlu0 0
    %607 = vperm.xlu0 %606, %v605
    %v608 = vpop.permute.xlu0 %607
    %vm609 = vcmp.eq.s32.totalorder %v608, 1
    %v610 = vsel %vm609, %v603, %v450
    %v611 = vsel %vm609, %v601, %v451
    %s612 = scalar_lea.vmem [#allocation2], 96
    %v613 = vld [vmem:[%s612] sm:$0xff]
    %v614 = vld [vmem:[%s612 + $0x8] sm:$0xff]
    %v615 = vld [vmem:[%s612 + $0x10] sm:$0xff]
    %v616 = vld [vmem:[%s612 + $0x18] sm:$0xff]
    %617 = vmatpush.msra.mxu0 %v129
    %618 = vmatpush.msra.mxu0 %v125
    %619 = vmatpush.msra.mxu0 %v121
    %620 = vmatpush.msra.mxu0 %v117
    %621 = vmatpush.msra.mxu0 %v113
    %622 = vmatpush.msra.mxu0 %v109
    %623 = vmatpush.msra.mxu0 %v105
    %624 = vmatpush.msra.mxu0 %v101
    %625 = vmatpush.msra.mxu0 %v97
    %626 = vmatpush.msra.mxu0 %v93
    %627 = vmatpush.msra.mxu0 %v89
    %628 = vmatpush.msra.mxu0 %v85
    %629 = vmatpush.msra.mxu0 %v81
    %630 = vmatpush.msra.mxu0 %v77
    %631 = vmatpush.msra.mxu0 %v73
    %632 = vmatpush.msra.mxu0 %v69
    %633 = vmatmul.f32.gmra.mxu0 %v610
    %v634 = vpop.f32.mrf.mxu0
    %v635 = vadd.f32 0.0, %v634
    %636 = vdwg.mxu0
    %637 = vmatpush.msra.mxu0 %v130
    %638 = vmatpush.msra.mxu0 %v126
    %639 = vmatpush.msra.mxu0 %v122
    %640 = vmatpush.msra.mxu0 %v118
    %641 = vmatpush.msra.mxu0 %v114
    %642 = vmatpush.msra.mxu0 %v110
    %643 = vmatpush.msra.mxu0 %v106
    %644 = vmatpush.msra.mxu0 %v102
    %645 = vmatpush.msra.mxu0 %v98
    %646 = vmatpush.msra.mxu0 %v94
    %647 = vmatpush.msra.mxu0 %v90
    %648 = vmatpush.msra.mxu0 %v86
    %649 = vmatpush.msra.mxu0 %v82
    %650 = vmatpush.msra.mxu0 %v78
    %651 = vmatpush.msra.mxu0 %v74
    %652 = vmatpush.msra.mxu0 %v70
    %653 = vmatmul.f32.gmra.mxu0 %v610
    %v654 = vpop.f32.mrf.mxu0
    %v655 = vadd.f32 0.0, %v654
    %656 = vdwg.mxu0
    %657 = vmatpush.msra.mxu0 %v131
    %658 = vmatpush.msra.mxu0 %v127
    %659 = vmatpush.msra.mxu0 %v123
    %660 = vmatpush.msra.mxu0 %v119
    %661 = vmatpush.msra.mxu0 %v115
    %662 = vmatpush.msra.mxu0 %v111
    %663 = vmatpush.msra.mxu0 %v107
    %664 = vmatpush.msra.mxu0 %v103
    %665 = vmatpush.msra.mxu0 %v99
    %666 = vmatpush.msra.mxu0 %v95
    %667 = vmatpush.msra.mxu0 %v91
    %668 = vmatpush.msra.mxu0 %v87
    %669 = vmatpush.msra.mxu0 %v83
    %670 = vmatpush.msra.mxu0 %v79
    %671 = vmatpush.msra.mxu0 %v75
    %672 = vmatpush.msra.mxu0 %v71
    %673 = vmatmul.f32.gmra.mxu0 %v610
    %v674 = vpop.f32.mrf.mxu0
    %v675 = vadd.f32 0.0, %v674
    %676 = vdwg.mxu0
    %677 = vmatpush.msra.mxu0 %v132
    %678 = vmatpush.msra.mxu0 %v128
    %679 = vmatpush.msra.mxu0 %v124
    %680 = vmatpush.msra.mxu0 %v120
    %681 = vmatpush.msra.mxu0 %v116
    %682 = vmatpush.msra.mxu0 %v112
    %683 = vmatpush.msra.mxu0 %v108
    %684 = vmatpush.msra.mxu0 %v104
    %685 = vmatpush.msra.mxu0 %v100
    %686 = vmatpush.msra.mxu0 %v96
    %687 = vmatpush.msra.mxu0 %v92
    %688 = vmatpush.msra.mxu0 %v88
    %689 = vmatpush.msra.mxu0 %v84
    %690 = vmatpush.msra.mxu0 %v80
    %691 = vmatpush.msra.mxu0 %v76
    %692 = vmatpush.msra.mxu0 %v72
    %693 = vmatmul.f32.gmra.mxu0 %v610
    %v694 = vpop.f32.mrf.mxu0
    %v695 = vadd.f32 0.0, %v694
    %696 = vdwg.mxu0
    %v697 = vadd.f32 %v613, %v635
    %v698 = vadd.f32 %v614, %v655
    %v699 = vadd.f32 %v615, %v675
    %v700 = vadd.f32 %v616, %v695
    %v701 = vxor.u32 %v697, 2147483648
    %v702 = vmul.f32 %v701, 1.442695
    %v703 = vpow.pop %v702
    %v704 = vadd.f32 %v703, 1.0
    %v705 = vrcp.pop %v704
    %v706 = vmul.f32 %v704, %v705
    %v707 = vsub.f32 1.0, %v706
    %v708 = vmul.f32 %v705, %v707
    %v709 = vadd.f32 %v705, %v708
    %vm710 = vweird.f32 %v704
    %vm711 = vweird.f32 %v705
    %vm712 = vmor %vm710, %vm711
    %v713 = vsel %vm712, %v705, %v709
    %v714 = vand.u32 2147483647, %v704
    %vm715 = vcmp.eq.f32.partialorder %v714, 8.507059e+37
    %v716 = vand.u32 %v704, 2147483648
    %v717 = vor.u32 1.1754944e-38, %v716
    %v718 = vsel %vm715, %v717, %v713
    %v719 = vmul.f32 1.0, %v718
    %v720 = vxor.u32 %v698, 2147483648
    %v721 = vmul.f32 %v720, 1.442695
    %v722 = vpow.pop %v721
    %v723 = vadd.f32 %v722, 1.0
    %v724 = vrcp.pop %v723
    %v725 = vmul.f32 %v723, %v724
    %v726 = vsub.f32 1.0, %v725
    %v727 = vmul.f32 %v724, %v726
    %v728 = vadd.f32 %v724, %v727
    %vm729 = vweird.f32 %v723
    %vm730 = vweird.f32 %v724
    %vm731 = vmor %vm729, %vm730
    %v732 = vsel %vm731, %v724, %v728
    %v733 = vand.u32 2147483647, %v723
    %vm734 = vcmp.eq.f32.partialorder %v733, 8.507059e+37
    %v735 = vand.u32 %v723, 2147483648
    %v736 = vor.u32 1.1754944e-38, %v735
    %v737 = vsel %vm734, %v736, %v732
    %v738 = vmul.f32 1.0, %v737
    %v739 = vtanh.pop %v699
    %v740 = vxor.u32 %v700, 2147483648
    %v741 = vmul.f32 %v740, 1.442695
    %v742 = vpow.pop %v741
    %v743 = vadd.f32 %v742, 1.0
    %v744 = vrcp.pop %v743
    %v745 = vmul.f32 %v743, %v744
    %v746 = vsub.f32 1.0, %v745
    %v747 = vmul.f32 %v744, %v746
    %v748 = vadd.f32 %v744, %v747
    %vm749 = vweird.f32 %v743
    %vm750 = vweird.f32 %v744
    %vm751 = vmor %vm749, %vm750
    %v752 = vsel %vm751, %v744, %v748
    %v753 = vand.u32 2147483647, %v743
    %vm754 = vcmp.eq.f32.partialorder %v753, 8.507059e+37
    %v755 = vand.u32 %v743, 2147483648
    %v756 = vor.u32 1.1754944e-38, %v755
    %v757 = vsel %vm754, %v756, %v752
    %v758 = vmul.f32 1.0, %v757
    %v759 = vmul.f32 %v738, %v611
    %v760 = vmul.f32 %v719, %v739
    %v761 = vadd.f32 %v759, %v760
    %v762 = vtanh.pop %v761
    %v763 = vmul.f32 %v758, %v762
    %vm764 = vcmp.gt.s32.totalorder %v68, 3
    %v765 = vsel %vm764, 1, 0
    %766 = vset.pattern.permute.xlu0 0
    %767 = vperm.xlu0 %766, %v765
    %v768 = vpop.permute.xlu0 %767
    %vm769 = vcmp.eq.s32.totalorder %v768, 1
    %v770 = vsel %vm769, %v763, %v610
    %v771 = vsel %vm769, %v761, %v611
    %s772 = scalar_lea.vmem [#allocation2], 128
    %v773 = vld [vmem:[%s772] sm:$0xff]
    %v774 = vld [vmem:[%s772 + $0x8] sm:$0xff]
    %v775 = vld [vmem:[%s772 + $0x10] sm:$0xff]
    %v776 = vld [vmem:[%s772 + $0x18] sm:$0xff]
    %777 = vmatpush.msra.mxu0 %v129
    %778 = vmatpush.msra.mxu0 %v125
    %779 = vmatpush.msra.mxu0 %v121
    %780 = vmatpush.msra.mxu0 %v117
    %781 = vmatpush.msra.mxu0 %v113
    %782 = vmatpush.msra.mxu0 %v109
    %783 = vmatpush.msra.mxu0 %v105
    %784 = vmatpush.msra.mxu0 %v101
    %785 = vmatpush.msra.mxu0 %v97
    %786 = vmatpush.msra.mxu0 %v93
    %787 = vmatpush.msra.mxu0 %v89
    %788 = vmatpush.msra.mxu0 %v85
    %789 = vmatpush.msra.mxu0 %v81
    %790 = vmatpush.msra.mxu0 %v77
    %791 = vmatpush.msra.mxu0 %v73
    %792 = vmatpush.msra.mxu0 %v69
    %793 = vmatmul.f32.gmra.mxu0 %v770
    %v794 = vpop.f32.mrf.mxu0
    %v795 = vadd.f32 0.0, %v794
    %796 = vdwg.mxu0
    %797 = vmatpush.msra.mxu0 %v130
    %798 = vmatpush.msra.mxu0 %v126
    %799 = vmatpush.msra.mxu0 %v122
    %800 = vmatpush.msra.mxu0 %v118
    %801 = vmatpush.msra.mxu0 %v114
    %802 = vmatpush.msra.mxu0 %v110
    %803 = vmatpush.msra.mxu0 %v106
    %804 = vmatpush.msra.mxu0 %v102
    %805 = vmatpush.msra.mxu0 %v98
    %806 = vmatpush.msra.mxu0 %v94
    %807 = vmatpush.msra.mxu0 %v90
    %808 = vmatpush.msra.mxu0 %v86
    %809 = vmatpush.msra.mxu0 %v82
    %810 = vmatpush.msra.mxu0 %v78
    %811 = vmatpush.msra.mxu0 %v74
    %812 = vmatpush.msra.mxu0 %v70
    %813 = vmatmul.f32.gmra.mxu0 %v770
    %v814 = vpop.f32.mrf.mxu0
    %v815 = vadd.f32 0.0, %v814
    %816 = vdwg.mxu0
    %817 = vmatpush.msra.mxu0 %v131
    %818 = vmatpush.msra.mxu0 %v127
    %819 = vmatpush.msra.mxu0 %v123
    %820 = vmatpush.msra.mxu0 %v119
    %821 = vmatpush.msra.mxu0 %v115
    %822 = vmatpush.msra.mxu0 %v111
    %823 = vmatpush.msra.mxu0 %v107
    %824 = vmatpush.msra.mxu0 %v103
    %825 = vmatpush.msra.mxu0 %v99
    %826 = vmatpush.msra.mxu0 %v95
    %827 = vmatpush.msra.mxu0 %v91
    %828 = vmatpush.msra.mxu0 %v87
    %829 = vmatpush.msra.mxu0 %v83
    %830 = vmatpush.msra.mxu0 %v79
    %831 = vmatpush.msra.mxu0 %v75
    %832 = vmatpush.msra.mxu0 %v71
    %833 = vmatmul.f32.gmra.mxu0 %v770
    %v834 = vpop.f32.mrf.mxu0
    %v835 = vadd.f32 0.0, %v834
    %836 = vdwg.mxu0
    %837 = vmatpush.msra.mxu0 %v132
    %838 = vmatpush.msra.mxu0 %v128
    %839 = vmatpush.msra.mxu0 %v124
    %840 = vmatpush.msra.mxu0 %v120
    %841 = vmatpush.msra.mxu0 %v116
    %842 = vmatpush.msra.mxu0 %v112
    %843 = vmatpush.msra.mxu0 %v108
    %844 = vmatpush.msra.mxu0 %v104
    %845 = vmatpush.msra.mxu0 %v100
    %846 = vmatpush.msra.mxu0 %v96
    %847 = vmatpush.msra.mxu0 %v92
    %848 = vmatpush.msra.mxu0 %v88
    %849 = vmatpush.msra.mxu0 %v84
    %850 = vmatpush.msra.mxu0 %v80
    %851 = vmatpush.msra.mxu0 %v76
    %852 = vmatpush.msra.mxu0 %v72
    %853 = vmatmul.f32.gmra.mxu0 %v770
    %v854 = vpop.f32.mrf.mxu0
    %v855 = vadd.f32 0.0, %v854
    %856 = vdwg.mxu0
    %v857 = vadd.f32 %v773, %v795
    %v858 = vadd.f32 %v774, %v815
    %v859 = vadd.f32 %v775, %v835
    %v860 = vadd.f32 %v776, %v855
    %v861 = vxor.u32 %v857, 2147483648
    %v862 = vmul.f32 %v861, 1.442695
    %v863 = vpow.pop %v862
    %v864 = vadd.f32 %v863, 1.0
    %v865 = vrcp.pop %v864
    %v866 = vmul.f32 %v864, %v865
    %v867 = vsub.f32 1.0, %v866
    %v868 = vmul.f32 %v865, %v867
    %v869 = vadd.f32 %v865, %v868
    %vm870 = vweird.f32 %v864
    %vm871 = vweird.f32 %v865
    %vm872 = vmor %vm870, %vm871
    %v873 = vsel %vm872, %v865, %v869
    %v874 = vand.u32 2147483647, %v864
    %vm875 = vcmp.eq.f32.partialorder %v874, 8.507059e+37
    %v876 = vand.u32 %v864, 2147483648
    %v877 = vor.u32 1.1754944e-38, %v876
    %v878 = vsel %vm875, %v877, %v873
    %v879 = vmul.f32 1.0, %v878
    %v880 = vxor.u32 %v858, 2147483648
    %v881 = vmul.f32 %v880, 1.442695
    %v882 = vpow.pop %v881
    %v883 = vadd.f32 %v882, 1.0
    %v884 = vrcp.pop %v883
    %v885 = vmul.f32 %v883, %v884
    %v886 = vsub.f32 1.0, %v885
    %v887 = vmul.f32 %v884, %v886
    %v888 = vadd.f32 %v884, %v887
    %vm889 = vweird.f32 %v883
    %vm890 = vweird.f32 %v884
    %vm891 = vmor %vm889, %vm890
    %v892 = vsel %vm891, %v884, %v888
    %v893 = vand.u32 2147483647, %v883
    %vm894 = vcmp.eq.f32.partialorder %v893, 8.507059e+37
    %v895 = vand.u32 %v883, 2147483648
    %v896 = vor.u32 1.1754944e-38, %v895
    %v897 = vsel %vm894, %v896, %v892
    %v898 = vmul.f32 1.0, %v897
    %v899 = vtanh.pop %v859
    %v900 = vxor.u32 %v860, 2147483648
    %v901 = vmul.f32 %v900, 1.442695
    %v902 = vpow.pop %v901
    %v903 = vadd.f32 %v902, 1.0
    %v904 = vrcp.pop %v903
    %v905 = vmul.f32 %v903, %v904
    %v906 = vsub.f32 1.0, %v905
    %v907 = vmul.f32 %v904, %v906
    %v908 = vadd.f32 %v904, %v907
    %vm909 = vweird.f32 %v903
    %vm910 = vweird.f32 %v904
    %vm911 = vmor %vm909, %vm910
    %v912 = vsel %vm911, %v904, %v908
    %v913 = vand.u32 2147483647, %v903
    %vm914 = vcmp.eq.f32.partialorder %v913, 8.507059e+37
    %v915 = vand.u32 %v903, 2147483648
    %v916 = vor.u32 1.1754944e-38, %v915
    %v917 = vsel %vm914, %v916, %v912
    %v918 = vmul.f32 1.0, %v917
    %v919 = vmul.f32 %v898, %v771
    %v920 = vmul.f32 %v879, %v899
    %v921 = vadd.f32 %v919, %v920
    %v922 = vtanh.pop %v921
    %v923 = vmul.f32 %v918, %v922
    %vm924 = vcmp.gt.s32.totalorder %v68, 4
    %v925 = vsel %vm924, 1, 0
    %926 = vset.pattern.permute.xlu0 0
    %927 = vperm.xlu0 %926, %v925
    %v928 = vpop.permute.xlu0 %927
    %vm929 = vcmp.eq.s32.totalorder %v928, 1
    %v930 = vsel %vm929, %v923, %v770
    %v931 = vsel %vm929, %v921, %v771
    %s932 = scalar_lea.vmem [#allocation2], 160
    %v933 = vld [vmem:[%s932] sm:$0xff]
    %v934 = vld [vmem:[%s932 + $0x8] sm:$0xff]
    %v935 = vld [vmem:[%s932 + $0x10] sm:$0xff]
    %v936 = vld [vmem:[%s932 + $0x18] sm:$0xff]
    %937 = vmatpush.msra.mxu0 %v129
    %938 = vmatpush.msra.mxu0 %v125
    %939 = vmatpush.msra.mxu0 %v121
    %940 = vmatpush.msra.mxu0 %v117
    %941 = vmatpush.msra.mxu0 %v113
    %942 = vmatpush.msra.mxu0 %v109
    %943 = vmatpush.msra.mxu0 %v105
    %944 = vmatpush.msra.mxu0 %v101
    %945 = vmatpush.msra.mxu0 %v97
    %946 = vmatpush.msra.mxu0 %v93
    %947 = vmatpush.msra.mxu0 %v89
    %948 = vmatpush.msra.mxu0 %v85
    %949 = vmatpush.msra.mxu0 %v81
    %950 = vmatpush.msra.mxu0 %v77
    %951 = vmatpush.msra.mxu0 %v73
    %952 = vmatpush.msra.mxu0 %v69
    %953 = vmatmul.f32.gmra.mxu0 %v930
    %v954 = vpop.f32.mrf.mxu0
    %v955 = vadd.f32 0.0, %v954
    %956 = vdwg.mxu0
    %957 = vmatpush.msra.mxu0 %v130
    %958 = vmatpush.msra.mxu0 %v126
    %959 = vmatpush.msra.mxu0 %v122
    %960 = vmatpush.msra.mxu0 %v118
    %961 = vmatpush.msra.mxu0 %v114
    %962 = vmatpush.msra.mxu0 %v110
    %963 = vmatpush.msra.mxu0 %v106
    %964 = vmatpush.msra.mxu0 %v102
    %965 = vmatpush.msra.mxu0 %v98
    %966 = vmatpush.msra.mxu0 %v94
    %967 = vmatpush.msra.mxu0 %v90
    %968 = vmatpush.msra.mxu0 %v86
    %969 = vmatpush.msra.mxu0 %v82
    %970 = vmatpush.msra.mxu0 %v78
    %971 = vmatpush.msra.mxu0 %v74
    %972 = vmatpush.msra.mxu0 %v70
    %973 = vmatmul.f32.gmra.mxu0 %v930
    %v974 = vpop.f32.mrf.mxu0
    %v975 = vadd.f32 0.0, %v974
    %976 = vdwg.mxu0
    %977 = vmatpush.msra.mxu0 %v131
    %978 = vmatpush.msra.mxu0 %v127
    %979 = vmatpush.msra.mxu0 %v123
    %980 = vmatpush.msra.mxu0 %v119
    %981 = vmatpush.msra.mxu0 %v115
    %982 = vmatpush.msra.mxu0 %v111
    %983 = vmatpush.msra.mxu0 %v107
    %984 = vmatpush.msra.mxu0 %v103
    %985 = vmatpush.msra.mxu0 %v99
    %986 = vmatpush.msra.mxu0 %v95
    %987 = vmatpush.msra.mxu0 %v91
    %988 = vmatpush.msra.mxu0 %v87
    %989 = vmatpush.msra.mxu0 %v83
    %990 = vmatpush.msra.mxu0 %v79
    %991 = vmatpush.msra.mxu0 %v75
    %992 = vmatpush.msra.mxu0 %v71
    %993 = vmatmul.f32.gmra.mxu0 %v930
    %v994 = vpop.f32.mrf.mxu0
    %v995 = vadd.f32 0.0, %v994
    %996 = vdwg.mxu0
    %997 = vmatpush.msra.mxu0 %v132
    %998 = vmatpush.msra.mxu0 %v128
    %999 = vmatpush.msra.mxu0 %v124
    %1000 = vmatpush.msra.mxu0 %v120
    %1001 = vmatpush.msra.mxu0 %v116
    %1002 = vmatpush.msra.mxu0 %v112
    %1003 = vmatpush.msra.mxu0 %v108
    %1004 = vmatpush.msra.mxu0 %v104
    %1005 = vmatpush.msra.mxu0 %v100
    %1006 = vmatpush.msra.mxu0 %v96
    %1007 = vmatpush.msra.mxu0 %v92
    %1008 = vmatpush.msra.mxu0 %v88
    %1009 = vmatpush.msra.mxu0 %v84
    %1010 = vmatpush.msra.mxu0 %v80
    %1011 = vmatpush.msra.mxu0 %v76
    %1012 = vmatpush.msra.mxu0 %v72
    %1013 = vmatmul.f32.gmra.mxu0 %v930
    %v1014 = vpop.f32.mrf.mxu0
    %v1015 = vadd.f32 0.0, %v1014
    %1016 = vdwg.mxu0
    %v1017 = vadd.f32 %v933, %v955
    %v1018 = vadd.f32 %v934, %v975
    %v1019 = vadd.f32 %v935, %v995
    %v1020 = vadd.f32 %v936, %v1015
    %v1021 = vxor.u32 %v1017, 2147483648
    %v1022 = vmul.f32 %v1021, 1.442695
    %v1023 = vpow.pop %v1022
    %v1024 = vadd.f32 %v1023, 1.0
    %v1025 = vrcp.pop %v1024
    %v1026 = vmul.f32 %v1024, %v1025
    %v1027 = vsub.f32 1.0, %v1026
    %v1028 = vmul.f32 %v1025, %v1027
    %v1029 = vadd.f32 %v1025, %v1028
    %vm1030 = vweird.f32 %v1024
    %vm1031 = vweird.f32 %v1025
    %vm1032 = vmor %vm1030, %vm1031
    %v1033 = vsel %vm1032, %v1025, %v1029
    %v1034 = vand.u32 2147483647, %v1024
    %vm1035 = vcmp.eq.f32.partialorder %v1034, 8.507059e+37
    %v1036 = vand.u32 %v1024, 2147483648
    %v1037 = vor.u32 1.1754944e-38, %v1036
    %v1038 = vsel %vm1035, %v1037, %v1033
    %v1039 = vmul.f32 1.0, %v1038
    %v1040 = vxor.u32 %v1018, 2147483648
    %v1041 = vmul.f32 %v1040, 1.442695
    %v1042 = vpow.pop %v1041
    %v1043 = vadd.f32 %v1042, 1.0
    %v1044 = vrcp.pop %v1043
    %v1045 = vmul.f32 %v1043, %v1044
    %v1046 = vsub.f32 1.0, %v1045
    %v1047 = vmul.f32 %v1044, %v1046
    %v1048 = vadd.f32 %v1044, %v1047
    %vm1049 = vweird.f32 %v1043
    %vm1050 = vweird.f32 %v1044
    %vm1051 = vmor %vm1049, %vm1050
    %v1052 = vsel %vm1051, %v1044, %v1048
    %v1053 = vand.u32 2147483647, %v1043
    %vm1054 = vcmp.eq.f32.partialorder %v1053, 8.507059e+37
    %v1055 = vand.u32 %v1043, 2147483648
    %v1056 = vor.u32 1.1754944e-38, %v1055
    %v1057 = vsel %vm1054, %v1056, %v1052
    %v1058 = vmul.f32 1.0, %v1057
    %v1059 = vtanh.pop %v1019
    %v1060 = vxor.u32 %v1020, 2147483648
    %v1061 = vmul.f32 %v1060, 1.442695
    %v1062 = vpow.pop %v1061
    %v1063 = vadd.f32 %v1062, 1.0
    %v1064 = vrcp.pop %v1063
    %v1065 = vmul.f32 %v1063, %v1064
    %v1066 = vsub.f32 1.0, %v1065
    %v1067 = vmul.f32 %v1064, %v1066
    %v1068 = vadd.f32 %v1064, %v1067
    %vm1069 = vweird.f32 %v1063
    %vm1070 = vweird.f32 %v1064
    %vm1071 = vmor %vm1069, %vm1070
    %v1072 = vsel %vm1071, %v1064, %v1068
    %v1073 = vand.u32 2147483647, %v1063
    %vm1074 = vcmp.eq.f32.partialorder %v1073, 8.507059e+37
    %v1075 = vand.u32 %v1063, 2147483648
    %v1076 = vor.u32 1.1754944e-38, %v1075
    %v1077 = vsel %vm1074, %v1076, %v1072
    %v1078 = vmul.f32 1.0, %v1077
    %v1079 = vmul.f32 %v1058, %v931
    %v1080 = vmul.f32 %v1039, %v1059
    %v1081 = vadd.f32 %v1079, %v1080
    %v1082 = vtanh.pop %v1081
    %v1083 = vmul.f32 %v1078, %v1082
    %vm1084 = vcmp.gt.s32.totalorder %v68, 5
    %v1085 = vsel %vm1084, 1, 0
    %1086 = vset.pattern.permute.xlu0 0
    %1087 = vperm.xlu0 %1086, %v1085
    %v1088 = vpop.permute.xlu0 %1087
    %vm1089 = vcmp.eq.s32.totalorder %v1088, 1
    %v1090 = vsel %vm1089, %v1083, %v930
    %v1091 = vsel %vm1089, %v1081, %v931
    %s1092 = scalar_lea.vmem [#allocation2], 192
    %v1093 = vld [vmem:[%s1092] sm:$0xff]
    %v1094 = vld [vmem:[%s1092 + $0x8] sm:$0xff]
    %v1095 = vld [vmem:[%s1092 + $0x10] sm:$0xff]
    %v1096 = vld [vmem:[%s1092 + $0x18] sm:$0xff]
    %1097 = vmatpush.msra.mxu0 %v129
    %1098 = vmatpush.msra.mxu0 %v125
    %1099 = vmatpush.msra.mxu0 %v121
    %1100 = vmatpush.msra.mxu0 %v117
    %1101 = vmatpush.msra.mxu0 %v113
    %1102 = vmatpush.msra.mxu0 %v109
    %1103 = vmatpush.msra.mxu0 %v105
    %1104 = vmatpush.msra.mxu0 %v101
    %1105 = vmatpush.msra.mxu0 %v97
    %1106 = vmatpush.msra.mxu0 %v93
    %1107 = vmatpush.msra.mxu0 %v89
    %1108 = vmatpush.msra.mxu0 %v85
    %1109 = vmatpush.msra.mxu0 %v81
    %1110 = vmatpush.msra.mxu0 %v77
    %1111 = vmatpush.msra.mxu0 %v73
    %1112 = vmatpush.msra.mxu0 %v69
    %1113 = vmatmul.f32.gmra.mxu0 %v1090
    %v1114 = vpop.f32.mrf.mxu0
    %v1115 = vadd.f32 0.0, %v1114
    %1116 = vdwg.mxu0
    %1117 = vmatpush.msra.mxu0 %v130
    %1118 = vmatpush.msra.mxu0 %v126
    %1119 = vmatpush.msra.mxu0 %v122
    %1120 = vmatpush.msra.mxu0 %v118
    %1121 = vmatpush.msra.mxu0 %v114
    %1122 = vmatpush.msra.mxu0 %v110
    %1123 = vmatpush.msra.mxu0 %v106
    %1124 = vmatpush.msra.mxu0 %v102
    %1125 = vmatpush.msra.mxu0 %v98
    %1126 = vmatpush.msra.mxu0 %v94
    %1127 = vmatpush.msra.mxu0 %v90
    %1128 = vmatpush.msra.mxu0 %v86
    %1129 = vmatpush.msra.mxu0 %v82
    %1130 = vmatpush.msra.mxu0 %v78
    %1131 = vmatpush.msra.mxu0 %v74
    %1132 = vmatpush.msra.mxu0 %v70
    %1133 = vmatmul.f32.gmra.mxu0 %v1090
    %v1134 = vpop.f32.mrf.mxu0
    %v1135 = vadd.f32 0.0, %v1134
    %1136 = vdwg.mxu0
    %1137 = vmatpush.msra.mxu0 %v131
    %1138 = vmatpush.msra.mxu0 %v127
    %1139 = vmatpush.msra.mxu0 %v123
    %1140 = vmatpush.msra.mxu0 %v119
    %1141 = vmatpush.msra.mxu0 %v115
    %1142 = vmatpush.msra.mxu0 %v111
    %1143 = vmatpush.msra.mxu0 %v107
    %1144 = vmatpush.msra.mxu0 %v103
    %1145 = vmatpush.msra.mxu0 %v99
    %1146 = vmatpush.msra.mxu0 %v95
    %1147 = vmatpush.msra.mxu0 %v91
    %1148 = vmatpush.msra.mxu0 %v87
    %1149 = vmatpush.msra.mxu0 %v83
    %1150 = vmatpush.msra.mxu0 %v79
    %1151 = vmatpush.msra.mxu0 %v75
    %1152 = vmatpush.msra.mxu0 %v71
    %1153 = vmatmul.f32.gmra.mxu0 %v1090
    %v1154 = vpop.f32.mrf.mxu0
    %v1155 = vadd.f32 0.0, %v1154
    %1156 = vdwg.mxu0
    %1157 = vmatpush.msra.mxu0 %v132
    %1158 = vmatpush.msra.mxu0 %v128
    %1159 = vmatpush.msra.mxu0 %v124
    %1160 = vmatpush.msra.mxu0 %v120
    %1161 = vmatpush.msra.mxu0 %v116
    %1162 = vmatpush.msra.mxu0 %v112
    %1163 = vmatpush.msra.mxu0 %v108
    %1164 = vmatpush.msra.mxu0 %v104
    %1165 = vmatpush.msra.mxu0 %v100
    %1166 = vmatpush.msra.mxu0 %v96
    %1167 = vmatpush.msra.mxu0 %v92
    %1168 = vmatpush.msra.mxu0 %v88
    %1169 = vmatpush.msra.mxu0 %v84
    %1170 = vmatpush.msra.mxu0 %v80
    %1171 = vmatpush.msra.mxu0 %v76
    %1172 = vmatpush.msra.mxu0 %v72
    %1173 = vmatmul.f32.gmra.mxu0 %v1090
    %v1174 = vpop.f32.mrf.mxu0
    %v1175 = vadd.f32 0.0, %v1174
    %1176 = vdwg.mxu0
    %v1177 = vadd.f32 %v1093, %v1115
    %v1178 = vadd.f32 %v1094, %v1135
    %v1179 = vadd.f32 %v1095, %v1155
    %v1180 = vadd.f32 %v1096, %v1175
    %v1181 = vxor.u32 %v1177, 2147483648
    %v1182 = vmul.f32 %v1181, 1.442695
    %v1183 = vpow.pop %v1182
    %v1184 = vadd.f32 %v1183, 1.0
    %v1185 = vrcp.pop %v1184
    %v1186 = vmul.f32 %v1184, %v1185
    %v1187 = vsub.f32 1.0, %v1186
    %v1188 = vmul.f32 %v1185, %v1187
    %v1189 = vadd.f32 %v1185, %v1188
    %vm1190 = vweird.f32 %v1184
    %vm1191 = vweird.f32 %v1185
    %vm1192 = vmor %vm1190, %vm1191
    %v1193 = vsel %vm1192, %v1185, %v1189
    %v1194 = vand.u32 2147483647, %v1184
    %vm1195 = vcmp.eq.f32.partialorder %v1194, 8.507059e+37
    %v1196 = vand.u32 %v1184, 2147483648
    %v1197 = vor.u32 1.1754944e-38, %v1196
    %v1198 = vsel %vm1195, %v1197, %v1193
    %v1199 = vmul.f32 1.0, %v1198
    %v1200 = vxor.u32 %v1178, 2147483648
    %v1201 = vmul.f32 %v1200, 1.442695
    %v1202 = vpow.pop %v1201
    %v1203 = vadd.f32 %v1202, 1.0
    %v1204 = vrcp.pop %v1203
    %v1205 = vmul.f32 %v1203, %v1204
    %v1206 = vsub.f32 1.0, %v1205
    %v1207 = vmul.f32 %v1204, %v1206
    %v1208 = vadd.f32 %v1204, %v1207
    %vm1209 = vweird.f32 %v1203
    %vm1210 = vweird.f32 %v1204
    %vm1211 = vmor %vm1209, %vm1210
    %v1212 = vsel %vm1211, %v1204, %v1208
    %v1213 = vand.u32 2147483647, %v1203
    %vm1214 = vcmp.eq.f32.partialorder %v1213, 8.507059e+37
    %v1215 = vand.u32 %v1203, 2147483648
    %v1216 = vor.u32 1.1754944e-38, %v1215
    %v1217 = vsel %vm1214, %v1216, %v1212
    %v1218 = vmul.f32 1.0, %v1217
    %v1219 = vtanh.pop %v1179
    %v1220 = vxor.u32 %v1180, 2147483648
    %v1221 = vmul.f32 %v1220, 1.442695
    %v1222 = vpow.pop %v1221
    %v1223 = vadd.f32 %v1222, 1.0
    %v1224 = vrcp.pop %v1223
    %v1225 = vmul.f32 %v1223, %v1224
    %v1226 = vsub.f32 1.0, %v1225
    %v1227 = vmul.f32 %v1224, %v1226
    %v1228 = vadd.f32 %v1224, %v1227
    %vm1229 = vweird.f32 %v1223
    %vm1230 = vweird.f32 %v1224
    %vm1231 = vmor %vm1229, %vm1230
    %v1232 = vsel %vm1231, %v1224, %v1228
    %v1233 = vand.u32 2147483647, %v1223
    %vm1234 = vcmp.eq.f32.partialorder %v1233, 8.507059e+37
    %v1235 = vand.u32 %v1223, 2147483648
    %v1236 = vor.u32 1.1754944e-38, %v1235
    %v1237 = vsel %vm1234, %v1236, %v1232
    %v1238 = vmul.f32 1.0, %v1237
    %v1239 = vmul.f32 %v1218, %v1091
    %v1240 = vmul.f32 %v1199, %v1219
    %v1241 = vadd.f32 %v1239, %v1240
    %v1242 = vtanh.pop %v1241
    %v1243 = vmul.f32 %v1238, %v1242
    %vm1244 = vcmp.gt.s32.totalorder %v68, 6
    %v1245 = vsel %vm1244, 1, 0
    %1246 = vset.pattern.permute.xlu0 0
    %1247 = vperm.xlu0 %1246, %v1245
    %v1248 = vpop.permute.xlu0 %1247
    %vm1249 = vcmp.eq.s32.totalorder %v1248, 1
    %v1250 = vsel %vm1249, %v1243, %v1090
    %v1251 = vsel %vm1249, %v1241, %v1091
    %s1252 = scalar_lea.vmem [#allocation2], 224
    %v1253 = vld [vmem:[%s1252] sm:$0xff]
    %v1254 = vld [vmem:[%s1252 + $0x8] sm:$0xff]
    %v1255 = vld [vmem:[%s1252 + $0x10] sm:$0xff]
    %v1256 = vld [vmem:[%s1252 + $0x18] sm:$0xff]
    %1257 = vmatpush.msra.mxu0 %v129
    %1258 = vmatpush.msra.mxu0 %v125
    %1259 = vmatpush.msra.mxu0 %v121
    %1260 = vmatpush.msra.mxu0 %v117
    %1261 = vmatpush.msra.mxu0 %v113
    %1262 = vmatpush.msra.mxu0 %v109
    %1263 = vmatpush.msra.mxu0 %v105
    %1264 = vmatpush.msra.mxu0 %v101
    %1265 = vmatpush.msra.mxu0 %v97
    %1266 = vmatpush.msra.mxu0 %v93
    %1267 = vmatpush.msra.mxu0 %v89
    %1268 = vmatpush.msra.mxu0 %v85
    %1269 = vmatpush.msra.mxu0 %v81
    %1270 = vmatpush.msra.mxu0 %v77
    %1271 = vmatpush.msra.mxu0 %v73
    %1272 = vmatpush.msra.mxu0 %v69
    %1273 = vmatmul.f32.gmra.mxu0 %v1250
    %v1274 = vpop.f32.mrf.mxu0
    %v1275 = vadd.f32 0.0, %v1274
    %1276 = vdwg.mxu0
    %1277 = vmatpush.msra.mxu0 %v130
    %1278 = vmatpush.msra.mxu0 %v126
    %1279 = vmatpush.msra.mxu0 %v122
    %1280 = vmatpush.msra.mxu0 %v118
    %1281 = vmatpush.msra.mxu0 %v114
    %1282 = vmatpush.msra.mxu0 %v110
    %1283 = vmatpush.msra.mxu0 %v106
    %1284 = vmatpush.msra.mxu0 %v102
    %1285 = vmatpush.msra.mxu0 %v98
    %1286 = vmatpush.msra.mxu0 %v94
    %1287 = vmatpush.msra.mxu0 %v90
    %1288 = vmatpush.msra.mxu0 %v86
    %1289 = vmatpush.msra.mxu0 %v82
    %1290 = vmatpush.msra.mxu0 %v78
    %1291 = vmatpush.msra.mxu0 %v74
    %1292 = vmatpush.msra.mxu0 %v70
    %1293 = vmatmul.f32.gmra.mxu0 %v1250
    %v1294 = vpop.f32.mrf.mxu0
    %v1295 = vadd.f32 0.0, %v1294
    %1296 = vdwg.mxu0
    %1297 = vmatpush.msra.mxu0 %v131
    %1298 = vmatpush.msra.mxu0 %v127
    %1299 = vmatpush.msra.mxu0 %v123
    %1300 = vmatpush.msra.mxu0 %v119
    %1301 = vmatpush.msra.mxu0 %v115
    %1302 = vmatpush.msra.mxu0 %v111
    %1303 = vmatpush.msra.mxu0 %v107
    %1304 = vmatpush.msra.mxu0 %v103
    %1305 = vmatpush.msra.mxu0 %v99
    %1306 = vmatpush.msra.mxu0 %v95
    %1307 = vmatpush.msra.mxu0 %v91
    %1308 = vmatpush.msra.mxu0 %v87
    %1309 = vmatpush.msra.mxu0 %v83
    %1310 = vmatpush.msra.mxu0 %v79
    %1311 = vmatpush.msra.mxu0 %v75
    %1312 = vmatpush.msra.mxu0 %v71
    %1313 = vmatmul.f32.gmra.mxu0 %v1250
    %v1314 = vpop.f32.mrf.mxu0
    %v1315 = vadd.f32 0.0, %v1314
    %1316 = vdwg.mxu0
    %1317 = vmatpush.msra.mxu0 %v132
    %1318 = vmatpush.msra.mxu0 %v128
    %1319 = vmatpush.msra.mxu0 %v124
    %1320 = vmatpush.msra.mxu0 %v120
    %1321 = vmatpush.msra.mxu0 %v116
    %1322 = vmatpush.msra.mxu0 %v112
    %1323 = vmatpush.msra.mxu0 %v108
    %1324 = vmatpush.msra.mxu0 %v104
    %1325 = vmatpush.msra.mxu0 %v100
    %1326 = vmatpush.msra.mxu0 %v96
    %1327 = vmatpush.msra.mxu0 %v92
    %1328 = vmatpush.msra.mxu0 %v88
    %1329 = vmatpush.msra.mxu0 %v84
    %1330 = vmatpush.msra.mxu0 %v80
    %1331 = vmatpush.msra.mxu0 %v76
    %1332 = vmatpush.msra.mxu0 %v72
    %1333 = vmatmul.f32.gmra.mxu0 %v1250
    %v1334 = vpop.f32.mrf.mxu0
    %v1335 = vadd.f32 0.0, %v1334
    %1336 = vdwg.mxu0
    %v1337 = vadd.f32 %v1253, %v1275
    %v1338 = vadd.f32 %v1254, %v1295
    %v1339 = vadd.f32 %v1255, %v1315
    %v1340 = vadd.f32 %v1256, %v1335
    %v1341 = vxor.u32 %v1337, 2147483648
    %v1342 = vmul.f32 %v1341, 1.442695
    %v1343 = vpow.pop %v1342
    %v1344 = vadd.f32 %v1343, 1.0
    %v1345 = vrcp.pop %v1344
    %v1346 = vmul.f32 %v1344, %v1345
    %v1347 = vsub.f32 1.0, %v1346
    %v1348 = vmul.f32 %v1345, %v1347
    %v1349 = vadd.f32 %v1345, %v1348
    %vm1350 = vweird.f32 %v1344
    %vm1351 = vweird.f32 %v1345
    %vm1352 = vmor %vm1350, %vm1351
    %v1353 = vsel %vm1352, %v1345, %v1349
    %v1354 = vand.u32 2147483647, %v1344
    %vm1355 = vcmp.eq.f32.partialorder %v1354, 8.507059e+37
    %v1356 = vand.u32 %v1344, 2147483648
    %v1357 = vor.u32 1.1754944e-38, %v1356
    %v1358 = vsel %vm1355, %v1357, %v1353
    %v1359 = vmul.f32 1.0, %v1358
    %v1360 = vxor.u32 %v1338, 2147483648
    %v1361 = vmul.f32 %v1360, 1.442695
    %v1362 = vpow.pop %v1361
    %v1363 = vadd.f32 %v1362, 1.0
    %v1364 = vrcp.pop %v1363
    %v1365 = vmul.f32 %v1363, %v1364
    %v1366 = vsub.f32 1.0, %v1365
    %v1367 = vmul.f32 %v1364, %v1366
    %v1368 = vadd.f32 %v1364, %v1367
    %vm1369 = vweird.f32 %v1363
    %vm1370 = vweird.f32 %v1364
    %vm1371 = vmor %vm1369, %vm1370
    %v1372 = vsel %vm1371, %v1364, %v1368
    %v1373 = vand.u32 2147483647, %v1363
    %vm1374 = vcmp.eq.f32.partialorder %v1373, 8.507059e+37
    %v1375 = vand.u32 %v1363, 2147483648
    %v1376 = vor.u32 1.1754944e-38, %v1375
    %v1377 = vsel %vm1374, %v1376, %v1372
    %v1378 = vmul.f32 1.0, %v1377
    %v1379 = vtanh.pop %v1339
    %v1380 = vxor.u32 %v1340, 2147483648
    %v1381 = vmul.f32 %v1380, 1.442695
    %v1382 = vpow.pop %v1381
    %v1383 = vadd.f32 %v1382, 1.0
    %v1384 = vrcp.pop %v1383
    %v1385 = vmul.f32 %v1383, %v1384
    %v1386 = vsub.f32 1.0, %v1385
    %v1387 = vmul.f32 %v1384, %v1386
    %v1388 = vadd.f32 %v1384, %v1387
    %vm1389 = vweird.f32 %v1383
    %vm1390 = vweird.f32 %v1384
    %vm1391 = vmor %vm1389, %vm1390
    %v1392 = vsel %vm1391, %v1384, %v1388
    %v1393 = vand.u32 2147483647, %v1383
    %vm1394 = vcmp.eq.f32.partialorder %v1393, 8.507059e+37
    %v1395 = vand.u32 %v1383, 2147483648
    %v1396 = vor.u32 1.1754944e-38, %v1395
    %v1397 = vsel %vm1394, %v1396, %v1392
    %v1398 = vmul.f32 1.0, %v1397
    %v1399 = vmul.f32 %v1378, %v1251
    %v1400 = vmul.f32 %v1359, %v1379
    %v1401 = vadd.f32 %v1399, %v1400
    %v1402 = vtanh.pop %v1401
    %v1403 = vmul.f32 %v1398, %v1402
    %vm1404 = vcmp.gt.s32.totalorder %v68, 7
    %v1405 = vsel %vm1404, 1, 0
    %1406 = vset.pattern.permute.xlu0 0
    %1407 = vperm.xlu0 %1406, %v1405
    %v1408 = vpop.permute.xlu0 %1407
    %vm1409 = vcmp.eq.s32.totalorder %v1408, 1
    %v1410 = vsel %vm1409, %v1403, %v1250
    %v1411 = vld [vmem:[#allocation7] sm:$0xff]
    %v1412 = vld [vmem:[#allocation7 + $0x8] sm:$0xff]
    %v1413 = vld [vmem:[#allocation7 + $0x10] sm:$0xff]
    %v1414 = vld [vmem:[#allocation7 + $0x18] sm:$0xff]
    %v1415 = vld [vmem:[#allocation7 + $0x20] sm:$0xff]
    %v1416 = vld [vmem:[#allocation7 + $0x28] sm:$0xff]
    %v1417 = vld [vmem:[#allocation7 + $0x30] sm:$0xff]
    %v1418 = vld [vmem:[#allocation7 + $0x38] sm:$0xff]
    %v1419 = vld [vmem:[#allocation7 + $0x40] sm:$0xff]
    %v1420 = vld [vmem:[#allocation7 + $0x48] sm:$0xff]
    %v1421 = vld [vmem:[#allocation7 + $0x50] sm:$0xff]
    %v1422 = vld [vmem:[#allocation7 + $0x58] sm:$0xff]
    %v1423 = vld [vmem:[#allocation7 + $0x60] sm:$0xff]
    %v1424 = vld [vmem:[#allocation7 + $0x68] sm:$0xff]
    %v1425 = vld [vmem:[#allocation7 + $0x70] sm:$0xff]
    %v1426 = vld [vmem:[#allocation7 + $0x78] sm:$0xff]
    %v1427 = vld [vmem:[%s4] sm:$0x1]
    %v1429 = vperm.slane %v1427, 0
    %1431 = vmatpush.msra.mxu0 %v1426
    %1432 = vmatpush.msra.mxu0 %v1425
    %1433 = vmatpush.msra.mxu0 %v1424
    %1434 = vmatpush.msra.mxu0 %v1423
    %1435 = vmatpush.msra.mxu0 %v1422
    %1436 = vmatpush.msra.mxu0 %v1421
    %1437 = vmatpush.msra.mxu0 %v1420
    %1438 = vmatpush.msra.mxu0 %v1419
    %1439 = vmatpush.msra.mxu0 %v1418
    %1440 = vmatpush.msra.mxu0 %v1417
    %1441 = vmatpush.msra.mxu0 %v1416
    %1442 = vmatpush.msra.mxu0 %v1415
    %1443 = vmatpush.msra.mxu0 %v1414
    %1444 = vmatpush.msra.mxu0 %v1413
    %1445 = vmatpush.msra.mxu0 %v1412
    %1446 = vmatpush.msra.mxu0 %v1411
    %1447 = vmatmul.f32.gmra.mxu0 %v1410
    %v1448 = vpop.f32.mrf.mxu0
    %v1449 = vadd.f32 %v1429, %v1448
    %1450 = vdwg.mxu0
    %1451 = vst [vmem:[#allocation8] sm:$0xff] %v1449
    // Predicated region
    $region34: #{tpu_custom_call.1} parent=1 // pred_check
      _
    $region35: #{tpu_custom_call.1} parent=1 // pred_check_branch
      %1453 = sbr.rel (0) target = $region37
    $region36: #{tpu_custom_call.1} parent=1 // pred_region
      %1455 = vsyncadd [#allocation4], 0
      %s1457 = sshll.u32 [#allocation8], 4
      %s1458 = int_to_ptr.vmem [resolvable:$true] %s1457
      %s1459 = sshll.u32 %s5, 4
      %s1460 = int_to_ptr.hbm [resolvable:$true] %s1459
      %1462 = dma.vmem_to_hbm [thread:$0]  %s1458, 128, %s1460, [#allocation4]
    $region37: #{tpu_custom_call.1} parent=1 // pred_fallthru
      _
    // Predicated region
    $region38: #{tpu_custom_call.1} parent=1 // pred_check
      _
    $region39: #{tpu_custom_call.1} parent=1 // pred_check_branch
      %1464 = sbr.rel (0) target = $region41
    $region40: #{tpu_custom_call.1} parent=1 // pred_region
      %1466 = dma.done [#allocation4], 128
    $region41: #{tpu_custom_call.1} parent=1 // pred_fallthru
      _
    %1467 = vsyncpa [#allocation3], 1
    %1468 = vsyncpa [#allocation6], 1
    %1469 = vsyncpa [#allocation4], 1

</llo_original>
